<compile_context>
chip_gen: v7x
topology: tpu7x:2x2x1
jax: 0.10.0
libtpu: 0.0.40
codegen_flags: <defaults>
</compile_context>

<pallas_src>
import functools
import math

import jax
import jax.numpy as jnp
from jax import lax
from jax.experimental import pallas as pl
from jax.experimental.pallas import tpu as pltpu


# ---------------------------------------------------------------------------
# Fused kernel: depthwise (+bias,+ReLU) -> pointwise 1x1 (+bias), one batch
# image per grid step, everything resident in VMEM between the two convs.
# ---------------------------------------------------------------------------
def _sepconv_kernel(*refs, kh, kw, dil, pad, H, W, Hs1, Ws1, apply_relu,
                    has_sel):
    """refs = (x, dw_w, dw_b, pw_w, pw_b, [sel], out, xpad_scratch)

      x     : (1, Cin, H, W)         input block (any float dtype)
      dw_w  : (kh*kw, Cin, 1, 1)     depthwise taps, f32
      dw_b  : (Cin, 1)               depthwise bias, f32
      pw_w  : (Cout, Cin)            pointwise weight, f32
      pw_b  : (Cout, 1)              pointwise bias, f32
      sel   : (Hs1*Ws1, Hout*Wout)   0/1 stride-subsample matrix (stride>1 only)
      out   : (1, Cout, Hout*Wout)   lane-dense output block, f32
      xpad  : (Cin, H+2p, W+2p)      VMEM scratch holding the zero-padded input
    """
    if has_sel:
        (x_ref, dww_ref, dwb_ref, pww_ref, pwb_ref, sel_ref,
         o_ref, xpad_ref) = refs
    else:
        x_ref, dww_ref, dwb_ref, pww_ref, pwb_ref, o_ref, xpad_ref = refs
        sel_ref = None
    cin = x_ref.shape[1]

    # Stage the zero-padded input in VMEM (replaces the old jnp.pad HBM pass).
    if pad > 0:
        xpad_ref[...] = jnp.zeros_like(xpad_ref)
        xpad_ref[:, pad:pad + H, pad:pad + W] = x_ref[0].astype(jnp.float32)
    else:
        xpad_ref[...] = x_ref[0].astype(jnp.float32)

    # Depthwise conv (stride 1): k*k shifted MACs over all channels at once
    # on the VPU; per-channel scalar tap broadcast as (Cin, 1, 1).
    acc = jnp.zeros((cin, Hs1, Ws1), jnp.float32)
    for dh in range(kh):
        for dw_ in range(kw):
            win = xpad_ref[:, dh * dil:dh * dil + Hs1,
                           dw_ * dil:dw_ * dil + Ws1]
            acc = acc + win * dww_ref[dh * kw + dw_]
    y = acc.reshape(cin, Hs1 * Ws1)

    # stride > 1: subsample while still in VMEM via a 0/1 selection matmul
    # (exact element picking, commutes with bias/ReLU).
    if sel_ref is not None:
        y = jnp.dot(y, sel_ref[...], preferred_element_type=jnp.float32)

    y = y + dwb_ref[...]
    if apply_relu:
        y = jnp.maximum(y, 0.0)

    # Pointwise 1x1 conv: one MXU matmul, fused bias, single lane-dense store.
    out = jnp.dot(pww_ref[...], y, preferred_element_type=jnp.float32)
    o_ref[0] = (out + pwb_ref[...]).astype(o_ref.dtype)


# ---------------------------------------------------------------------------
# SepConv2d forward: depthwise -> (ReLU) -> pointwise     (torch semantics)
# ---------------------------------------------------------------------------
def sep_conv2d(x, dw_w, dw_b, pw_w, pw_b, *, stride=1, padding=0, dilation=1,
               apply_relu=True):
    """x: (N,Cin,H,W); dw_w: (Cin,1,kh,kw); dw_b: (Cin,);
       pw_w: (Cout,Cin,1,1); pw_b: (Cout,)  ->  (N,Cout,Hout,Wout) f32."""
    N, Cin, H, W = (int(d) for d in x.shape)
    kh, kw = int(dw_w.shape[2]), int(dw_w.shape[3])
    Cout = int(pw_w.shape[0])
    KK = kh * kw
    Hp, Wp = H + 2 * padding, W + 2 * padding
    Hs1 = Hp - dilation * (kh - 1)            # stride-1 depthwise output size
    Ws1 = Wp - dilation * (kw - 1)
    Hout = (Hs1 - 1) // stride + 1            # torch conv output size
    Wout = (Ws1 - 1) // stride + 1

    # Parameter repacking (tiny, one-time under jit).
    dww = jnp.transpose(dw_w.astype(jnp.float32),
                        (2, 3, 0, 1)).reshape(KK, Cin, 1, 1)
    dwb = dw_b.astype(jnp.float32).reshape(Cin, 1)
    pww = pw_w.astype(jnp.float32).reshape(Cout, Cin)
    pwb = pw_b.astype(jnp.float32).reshape(Cout, 1)

    inputs = [x, dww, dwb, pww, pwb]
    in_specs = [
        pl.BlockSpec((1, Cin, H, W), lambda n: (n, 0, 0, 0)),
        pl.BlockSpec((KK, Cin, 1, 1), lambda n: (0, 0, 0, 0)),
        pl.BlockSpec((Cin, 1), lambda n: (0, 0)),
        pl.BlockSpec((Cout, Cin), lambda n: (0, 0)),
        pl.BlockSpec((Cout, 1), lambda n: (0, 0)),
    ]
    has_sel = stride > 1
    if has_sel:
        # 0/1 matrix picking the strided positions out of the flattened
        # stride-1 output.  Constant, tiny next to x, folded by XLA.
        src = ((jnp.arange(Hout) * stride)[:, None] * Ws1 +
               (jnp.arange(Wout) * stride)[None, :]).reshape(-1)
        sel = (jnp.arange(Hs1 * Ws1)[:, None] == src[None, :]).astype(jnp.float32)
        inputs.append(sel)
        in_specs.append(pl.BlockSpec((Hs1 * Ws1, Hout * Wout),
                                     lambda n: (0, 0)))

    kern = functools.partial(
        _sepconv_kernel, kh=kh, kw=kw, dil=dilation, pad=padding, H=H, W=W,
        Hs1=Hs1, Ws1=Ws1, apply_relu=apply_relu, has_sel=has_sel)

    out = pl.pallas_call(
        kern,
        out_shape=jax.ShapeDtypeStruct((N, Cout, Hout * Wout), jnp.float32),
        grid_spec=pltpu.PrefetchScalarGridSpec(
            num_scalar_prefetch=0,
            grid=(N,),
            in_specs=in_specs,
            out_specs=pl.BlockSpec((1, Cout, Hout * Wout),
                                   lambda n: (n, 0, 0)),
            scratch_shapes=[pltpu.VMEM((Cin, Hp, Wp), jnp.float32)]),
        compiler_params=pltpu.CompilerParams(
            dimension_semantics=("parallel",),
            # Explicit scoped-VMEM budget; well under v7x's 64 MiB physical.
            vmem_limit_bytes=32 * 1024 * 1024),
    )(*inputs)
    return out.reshape(N, Cout, Hout, Wout)


# ---------------------------------------------------------------------------
# Pure-JAX reference (for correctness check only)
# ---------------------------------------------------------------------------
def sep_conv2d_ref(x, dw_w, dw_b, pw_w, pw_b, *, stride=1, padding=0,
                   dilation=1):
    y = lax.conv_general_dilated(
        x, dw_w, window_strides=(stride, stride),
        padding=[(padding, padding), (padding, padding)],
        rhs_dilation=(dilation, dilation),
        dimension_numbers=('NCHW', 'OIHW', 'NCHW'),
        feature_group_count=x.shape[1])
    y = jnp.maximum(y + dw_b[None, :, None, None], 0.0)
    z = lax.conv_general_dilated(
        y, pw_w, (1, 1), [(0, 0), (0, 0)],
        dimension_numbers=('NCHW', 'OIHW', 'NCHW'))
    return z + pw_b[None, :, None, None]


def _make_params(key, cin, cout, ksize):
    k2, k3, k4, k5 = jax.random.split(key, 4)
    bnd_dw = 1.0 / math.sqrt(ksize * ksize)          # fan_in = 1 * k * k
    dw_w = jax.random.uniform(k2, (cin, 1, ksize, ksize), jnp.float32,
                              -bnd_dw, bnd_dw)
    dw_b = jax.random.uniform(k3, (cin,), jnp.float32, -bnd_dw, bnd_dw)
    bnd_pw = 1.0 / math.sqrt(cin)
    pw_w = jax.random.uniform(k4, (cout, cin, 1, 1), jnp.float32,
                              -bnd_pw, bnd_pw)
    pw_b = jax.random.uniform(k5, (cout,), jnp.float32, -bnd_pw, bnd_pw)
    return dw_w, dw_b, pw_w, pw_b


if __name__ == "__main__":
    key = jax.random.PRNGKey(0)
    kx1, kp1, kx2, kp2 = jax.random.split(key, 4)

    # Case 1: batch=2, in=8, out=16, 16x16, k=3, stride=1, padding=1
    batch, cin, cout, H, W = 2, 8, 16, 16, 16
    ksize, stride, padding, dilation = 3, 1, 1, 1
    x = jax.random.normal(kx1, (batch, cin, H, W), jnp.float32)
    dw_w, dw_b, pw_w, pw_b = _make_params(kp1, cin, cout, ksize)

    fwd = jax.jit(functools.partial(sep_conv2d, stride=stride, padding=padding,
                                    dilation=dilation))
    out = jax.block_until_ready(fwd(x, dw_w, dw_b, pw_w, pw_b))
    assert out.shape == (batch, cout, H, W), out.shape
    assert bool(jnp.all(jnp.isfinite(out)))
    ref = sep_conv2d_ref(x, dw_w, dw_b, pw_w, pw_b, stride=stride,
                         padding=padding, dilation=dilation)
    err = float(jnp.max(jnp.abs(out - ref)))
    assert err < 5e-2, f"case1 max abs err {err}"

    # Case 2: strided variant (batch=2, in=4, out=8, 16x16, k=3, stride=2, pad=1)
    cin2, cout2, stride2 = 4, 8, 2
    x2 = jax.random.normal(kx2, (batch, cin2, H, W), jnp.float32)
    dw_w2, dw_b2, pw_w2, pw_b2 = _make_params(kp2, cin2, cout2, ksize)
    fwd2 = jax.jit(functools.partial(sep_conv2d, stride=stride2, padding=1,
                                     dilation=1))
    out2 = jax.block_until_ready(fwd2(x2, dw_w2, dw_b2, pw_w2, pw_b2))
    assert out2.shape == (batch, cout2, H // 2, W // 2), out2.shape
    ref2 = sep_conv2d_ref(x2, dw_w2, dw_b2, pw_w2, pw_b2, stride=stride2,
                          padding=1, dilation=1)
    err2 = float(jnp.max(jnp.abs(out2 - ref2)))
    assert err2 < 5e-2, f"case2 max abs err {err2}"

    print("KERNEL_OK")
</pallas_src>

<mosaic_0001>
module attributes {stable_mosaic.version = 11 : i64} {
  func.func @_sepconv_kernel(%arg0: i32, %arg1: memref<1x8x16x16xf32, #tpu.memory_space<vmem>>, %arg2: memref<9x8x1x1xf32, #tpu.memory_space<vmem>>, %arg3: memref<8x1xf32, #tpu.memory_space<vmem>>, %arg4: memref<16x8xf32, #tpu.memory_space<vmem>>, %arg5: memref<16x1xf32, #tpu.memory_space<vmem>>, %arg6: memref<1x16x256xf32, #tpu.memory_space<vmem>>, %arg7: memref<8x18x18xf32, #tpu.memory_space<vmem>>) attributes {dimension_semantics = [#tpu.dimension_semantics<parallel>], iteration_bounds = array<i64: 2>, scalar_prefetch = 0 : i64, scratch_operands = 1 : i64, tpu.core_type = #tpu.core_type<tc>, window_params = [{transform_indices = @transform_0, window_bounds = array<i64: 1, 8, 16, 16>}, {pipeline_mode = #tpu.pipeline_mode<synchronous>, transform_indices = @transform_1, window_bounds = array<i64: 9, 8, 1, 1>}, {pipeline_mode = #tpu.pipeline_mode<synchronous>, transform_indices = @transform_2, window_bounds = array<i64: 8, 1>}, {pipeline_mode = #tpu.pipeline_mode<synchronous>, transform_indices = @transform_3, window_bounds = array<i64: 16, 8>}, {pipeline_mode = #tpu.pipeline_mode<synchronous>, transform_indices = @transform_4, window_bounds = array<i64: 16, 1>}, {transform_indices = @transform_5, window_bounds = array<i64: 1, 16, 256>}]} {
    %cst = arith.constant 0.000000e+00 : f32
    %0 = vector.broadcast %cst : f32 to vector<8x18x18xf32>
    %c0 = arith.constant 0 : index
    %c0_0 = arith.constant 0 : index
    %c0_1 = arith.constant 0 : index
    %1 = vector.load %arg7[%c0, %c0_0, %c0_1] : memref<8x18x18xf32, #tpu.memory_space<vmem>>, vector<8x18x18xf32>
    tpu.vector_store %arg7[%c0, %c0_0, %c0_1], %0 {strides = array<i32>} : memref<8x18x18xf32, #tpu.memory_space<vmem>>, vector<8x18x18xf32>,
    %c0_2 = arith.constant 0 : index
    %c0_3 = arith.constant 0 : index
    %c0_4 = arith.constant 0 : index
    %c0_5 = arith.constant 0 : index
    %2 = vector.load %arg1[%c0_2, %c0_3, %c0_4, %c0_5] : memref<1x8x16x16xf32, #tpu.memory_space<vmem>>, vector<1x8x16x16xf32>
    %3 = vector.shape_cast %2 : vector<1x8x16x16xf32> to vector<8x16x16xf32>
    %c0_6 = arith.constant 0 : index
    %c1 = arith.constant 1 : index
    %c1_7 = arith.constant 1 : index
    %4 = vector.load %arg7[%c0_6, %c1, %c1_7] : memref<8x18x18xf32, #tpu.memory_space<vmem>>, vector<8x16x16xf32>
    tpu.vector_store %arg7[%c0_6, %c1, %c1_7], %3 {strides = array<i32>} : memref<8x18x18xf32, #tpu.memory_space<vmem>>, vector<8x16x16xf32>,
    %cst_8 = arith.constant 0.000000e+00 : f32
    %5 = vector.broadcast %cst_8 : f32 to vector<8x16x16xf32>
    %c0_9 = arith.constant 0 : index
    %c0_10 = arith.constant 0 : index
    %c0_11 = arith.constant 0 : index
    %6 = vector.load %arg7[%c0_9, %c0_10, %c0_11] : memref<8x18x18xf32, #tpu.memory_space<vmem>>, vector<8x16x16xf32>
    %c0_12 = arith.constant 0 : index
    %c0_13 = arith.constant 0 : index
    %c0_14 = arith.constant 0 : index
    %c0_15 = arith.constant 0 : index
    %7 = vector.load %arg2[%c0_12, %c0_13, %c0_14, %c0_15] : memref<9x8x1x1xf32, #tpu.memory_space<vmem>>, vector<1x8x1x1xf32>
    %8 = vector.shape_cast %7 : vector<1x8x1x1xf32> to vector<8x1x1xf32>
    %9 = vector.broadcast %8 : vector<8x1x1xf32> to vector<8x16x16xf32>
    %10 = arith.mulf %6, %9 : vector<8x16x16xf32>
    %11 = arith.addf %5, %10 : vector<8x16x16xf32>
    %c0_16 = arith.constant 0 : index
    %c0_17 = arith.constant 0 : index
    %c1_18 = arith.constant 1 : index
    %12 = vector.load %arg7[%c0_16, %c0_17, %c1_18] : memref<8x18x18xf32, #tpu.memory_space<vmem>>, vector<8x16x16xf32>
    %c1_19 = arith.constant 1 : index
    %c0_20 = arith.constant 0 : index
    %c0_21 = arith.constant 0 : index
    %c0_22 = arith.constant 0 : index
    %13 = vector.load %arg2[%c1_19, %c0_20, %c0_21, %c0_22] : memref<9x8x1x1xf32, #tpu.memory_space<vmem>>, vector<1x8x1x1xf32>
    %14 = vector.shape_cast %13 : vector<1x8x1x1xf32> to vector<8x1x1xf32>
    %15 = vector.broadcast %14 : vector<8x1x1xf32> to vector<8x16x16xf32>
    %16 = arith.mulf %12, %15 : vector<8x16x16xf32>
    %17 = arith.addf %11, %16 : vector<8x16x16xf32>
    %c0_23 = arith.constant 0 : index
    %c0_24 = arith.constant 0 : index
    %c2 = arith.constant 2 : index
    %18 = vector.load %arg7[%c0_23, %c0_24, %c2] : memref<8x18x18xf32, #tpu.memory_space<vmem>>, vector<8x16x16xf32>
    %c2_25 = arith.constant 2 : index
    %c0_26 = arith.constant 0 : index
    %c0_27 = arith.constant 0 : index
    %c0_28 = arith.constant 0 : index
    %19 = vector.load %arg2[%c2_25, %c0_26, %c0_27, %c0_28] : memref<9x8x1x1xf32, #tpu.memory_space<vmem>>, vector<1x8x1x1xf32>
    %20 = vector.shape_cast %19 : vector<1x8x1x1xf32> to vector<8x1x1xf32>
    %21 = vector.broadcast %20 : vector<8x1x1xf32> to vector<8x16x16xf32>
    %22 = arith.mulf %18, %21 : vector<8x16x16xf32>
    %23 = arith.addf %17, %22 : vector<8x16x16xf32>
    %c0_29 = arith.constant 0 : index
    %c1_30 = arith.constant 1 : index
    %c0_31 = arith.constant 0 : index
    %24 = vector.load %arg7[%c0_29, %c1_30, %c0_31] : memref<8x18x18xf32, #tpu.memory_space<vmem>>, vector<8x16x16xf32>
    %c3 = arith.constant 3 : index
    %c0_32 = arith.constant 0 : index
    %c0_33 = arith.constant 0 : index
    %c0_34 = arith.constant 0 : index
    %25 = vector.load %arg2[%c3, %c0_32, %c0_33, %c0_34] : memref<9x8x1x1xf32, #tpu.memory_space<vmem>>, vector<1x8x1x1xf32>
    %26 = vector.shape_cast %25 : vector<1x8x1x1xf32> to vector<8x1x1xf32>
    %27 = vector.broadcast %26 : vector<8x1x1xf32> to vector<8x16x16xf32>
    %28 = arith.mulf %24, %27 : vector<8x16x16xf32>
    %29 = arith.addf %23, %28 : vector<8x16x16xf32>
    %c0_35 = arith.constant 0 : index
    %c1_36 = arith.constant 1 : index
    %c1_37 = arith.constant 1 : index
    %30 = vector.load %arg7[%c0_35, %c1_36, %c1_37] : memref<8x18x18xf32, #tpu.memory_space<vmem>>, vector<8x16x16xf32>
    %c4 = arith.constant 4 : index
    %c0_38 = arith.constant 0 : index
    %c0_39 = arith.constant 0 : index
    %c0_40 = arith.constant 0 : index
    %31 = vector.load %arg2[%c4, %c0_38, %c0_39, %c0_40] : memref<9x8x1x1xf32, #tpu.memory_space<vmem>>, vector<1x8x1x1xf32>
    %32 = vector.shape_cast %31 : vector<1x8x1x1xf32> to vector<8x1x1xf32>
    %33 = vector.broadcast %32 : vector<8x1x1xf32> to vector<8x16x16xf32>
    %34 = arith.mulf %30, %33 : vector<8x16x16xf32>
    %35 = arith.addf %29, %34 : vector<8x16x16xf32>
    %c0_41 = arith.constant 0 : index
    %c1_42 = arith.constant 1 : index
    %c2_43 = arith.constant 2 : index
    %36 = vector.load %arg7[%c0_41, %c1_42, %c2_43] : memref<8x18x18xf32, #tpu.memory_space<vmem>>, vector<8x16x16xf32>
    %c5 = arith.constant 5 : index
    %c0_44 = arith.constant 0 : index
    %c0_45 = arith.constant 0 : index
    %c0_46 = arith.constant 0 : index
    %37 = vector.load %arg2[%c5, %c0_44, %c0_45, %c0_46] : memref<9x8x1x1xf32, #tpu.memory_space<vmem>>, vector<1x8x1x1xf32>
    %38 = vector.shape_cast %37 : vector<1x8x1x1xf32> to vector<8x1x1xf32>
    %39 = vector.broadcast %38 : vector<8x1x1xf32> to vector<8x16x16xf32>
    %40 = arith.mulf %36, %39 : vector<8x16x16xf32>
    %41 = arith.addf %35, %40 : vector<8x16x16xf32>
    %c0_47 = arith.constant 0 : index
    %c2_48 = arith.constant 2 : index
    %c0_49 = arith.constant 0 : index
    %42 = vector.load %arg7[%c0_47, %c2_48, %c0_49] : memref<8x18x18xf32, #tpu.memory_space<vmem>>, vector<8x16x16xf32>
    %c6 = arith.constant 6 : index
    %c0_50 = arith.constant 0 : index
    %c0_51 = arith.constant 0 : index
    %c0_52 = arith.constant 0 : index
    %43 = vector.load %arg2[%c6, %c0_50, %c0_51, %c0_52] : memref<9x8x1x1xf32, #tpu.memory_space<vmem>>, vector<1x8x1x1xf32>
    %44 = vector.shape_cast %43 : vector<1x8x1x1xf32> to vector<8x1x1xf32>
    %45 = vector.broadcast %44 : vector<8x1x1xf32> to vector<8x16x16xf32>
    %46 = arith.mulf %42, %45 : vector<8x16x16xf32>
    %47 = arith.addf %41, %46 : vector<8x16x16xf32>
    %c0_53 = arith.constant 0 : index
    %c2_54 = arith.constant 2 : index
    %c1_55 = arith.constant 1 : index
    %48 = vector.load %arg7[%c0_53, %c2_54, %c1_55] : memref<8x18x18xf32, #tpu.memory_space<vmem>>, vector<8x16x16xf32>
    %c7 = arith.constant 7 : index
    %c0_56 = arith.constant 0 : index
    %c0_57 = arith.constant 0 : index
    %c0_58 = arith.constant 0 : index
    %49 = vector.load %arg2[%c7, %c0_56, %c0_57, %c0_58] : memref<9x8x1x1xf32, #tpu.memory_space<vmem>>, vector<1x8x1x1xf32>
    %50 = vector.shape_cast %49 : vector<1x8x1x1xf32> to vector<8x1x1xf32>
    %51 = vector.broadcast %50 : vector<8x1x1xf32> to vector<8x16x16xf32>
    %52 = arith.mulf %48, %51 : vector<8x16x16xf32>
    %53 = arith.addf %47, %52 : vector<8x16x16xf32>
    %c0_59 = arith.constant 0 : index
    %c2_60 = arith.constant 2 : index
    %c2_61 = arith.constant 2 : index
    %54 = vector.load %arg7[%c0_59, %c2_60, %c2_61] : memref<8x18x18xf32, #tpu.memory_space<vmem>>, vector<8x16x16xf32>
    %c8 = arith.constant 8 : index
    %c0_62 = arith.constant 0 : index
    %c0_63 = arith.constant 0 : index
    %c0_64 = arith.constant 0 : index
    %55 = vector.load %arg2[%c8, %c0_62, %c0_63, %c0_64] : memref<9x8x1x1xf32, #tpu.memory_space<vmem>>, vector<1x8x1x1xf32>
    %56 = vector.shape_cast %55 : vector<1x8x1x1xf32> to vector<8x1x1xf32>
    %57 = vector.broadcast %56 : vector<8x1x1xf32> to vector<8x16x16xf32>
    %58 = arith.mulf %54, %57 : vector<8x16x16xf32>
    %59 = arith.addf %53, %58 : vector<8x16x16xf32>
    %60 = vector.shape_cast %59 : vector<8x16x16xf32> to vector<8x256xf32>
    %c0_65 = arith.constant 0 : index
    %c0_66 = arith.constant 0 : index
    %61 = vector.load %arg3[%c0_65, %c0_66] : memref<8x1xf32, #tpu.memory_space<vmem>>, vector<8x1xf32>
    %62 = vector.broadcast %61 : vector<8x1xf32> to vector<8x256xf32>
    %63 = arith.addf %60, %62 : vector<8x256xf32>
    %cst_67 = arith.constant 0.000000e+00 : f32
    %64 = vector.broadcast %cst_67 : f32 to vector<8x256xf32>
    %65 = arith.maximumf %63, %64 : vector<8x256xf32>
    %c0_68 = arith.constant 0 : index
    %c0_69 = arith.constant 0 : index
    %66 = vector.load %arg4[%c0_68, %c0_69] : memref<16x8xf32, #tpu.memory_space<vmem>>, vector<16x8xf32>
    %cst_70 = arith.constant dense<0.000000e+00> : vector<16x256xf32>
    %67 = tpu.matmul %66, %65, %cst_70 {dimension_numbers = #tpu.dot_dimension_numbers<[1], [0], [0], [1], [0, 0, 1, 1], [], []>} : vector<16x8xf32>, vector<8x256xf32>, vector<16x256xf32> -> vector<16x256xf32>
    %c0_71 = arith.constant 0 : index
    %c0_72 = arith.constant 0 : index
    %68 = vector.load %arg5[%c0_71, %c0_72] : memref<16x1xf32, #tpu.memory_space<vmem>>, vector<16x1xf32>
    %69 = vector.broadcast %68 : vector<16x1xf32> to vector<16x256xf32>
    %70 = arith.addf %67, %69 : vector<16x256xf32>
    %c0_73 = arith.constant 0 : index
    %c0_74 = arith.constant 0 : index
    %c0_75 = arith.constant 0 : index
    %71 = vector.load %arg6[%c0_73, %c0_74, %c0_75] : memref<1x16x256xf32, #tpu.memory_space<vmem>>, vector<1x16x256xf32>
    %72 = vector.shape_cast %71 : vector<1x16x256xf32> to vector<16x256xf32>
    %73 = vector.shape_cast %70 : vector<16x256xf32> to vector<1x16x256xf32>
    tpu.vector_store %arg6[%c0_73, %c0_74, %c0_75], %73 {strides = array<i32>} : memref<1x16x256xf32, #tpu.memory_space<vmem>>, vector<1x16x256xf32>,
    return
  }
  func.func @transform_0(%arg0: i32) -> (i32, i32, i32, i32) {
    %c0_i32 = arith.constant 0 : i32
    %c0_i32_0 = arith.constant 0 : i32
    %c0_i32_1 = arith.constant 0 : i32
    %c0_i32_2 = arith.constant 0 : i32
    return %arg0, %c0_i32, %c0_i32_0, %c0_i32_1 : i32, i32, i32, i32
  }
  func.func @transform_1(%arg0: i32) -> (i32, i32, i32, i32) {
    %c0_i32 = arith.constant 0 : i32
    %c0_i32_0 = arith.constant 0 : i32
    %c0_i32_1 = arith.constant 0 : i32
    %c0_i32_2 = arith.constant 0 : i32
    %c0_i32_3 = arith.constant 0 : i32
    return %c0_i32, %c0_i32_0, %c0_i32_1, %c0_i32_2 : i32, i32, i32, i32
  }
  func.func @transform_2(%arg0: i32) -> (i32, i32) {
    %c0_i32 = arith.constant 0 : i32
    %c0_i32_0 = arith.constant 0 : i32
    %c0_i32_1 = arith.constant 0 : i32
    return %c0_i32, %c0_i32_0 : i32, i32
  }
  func.func @transform_3(%arg0: i32) -> (i32, i32) {
    %c0_i32 = arith.constant 0 : i32
    %c0_i32_0 = arith.constant 0 : i32
    %c0_i32_1 = arith.constant 0 : i32
    return %c0_i32, %c0_i32_0 : i32, i32
  }
  func.func @transform_4(%arg0: i32) -> (i32, i32) {
    %c0_i32 = arith.constant 0 : i32
    %c0_i32_0 = arith.constant 0 : i32
    %c0_i32_1 = arith.constant 0 : i32
    return %c0_i32, %c0_i32_0 : i32, i32
  }
  func.func @transform_5(%arg0: i32) -> (i32, i32, i32) {
    %c0_i32 = arith.constant 0 : i32
    %c0_i32_0 = arith.constant 0 : i32
    %c0_i32_1 = arith.constant 0 : i32
    return %arg0, %c0_i32, %c0_i32_0 : i32, i32, i32
  }
}

</mosaic_0001>

<llo_original>
// kernel: sep_conv2d.1
$region0: #{sep_conv2d.1}
  #allocation0 [shape = 'u32[]', space=smem, size = 0x4, offset = 0x4, fixed_abs, tag = 'smem constant byte address 0x4 - core index']
  #allocation1 [shape = 'u32[144,128]{1,0:T(1,128)}', space=vmem, size = 0x12000, scoped, tag = 'internal scratch']
  #allocation2 [shape = 'f32[8,18,18]{2,1,0:T(8,128)}', space=vmem, size = 0x18000, scoped, tag = 'scratch operand']
  %s0 = inlined_call_operand.hbm [shape: f32[2,8,16,16], index: 0, kind: input, shape index: {}]
  %s1 = inlined_call_operand.vmem [shape: f32[9,8,1,1], index: 1, kind: input, shape index: {}]
  %s2 = inlined_call_operand.vmem [shape: f32[8,1], index: 2, kind: input, shape index: {}]
  %s3 = inlined_call_operand.vmem [shape: f32[16,8], index: 3, kind: input, shape index: {}]
  %s4 = inlined_call_operand.vmem [shape: f32[16,1], index: 4, kind: input, shape index: {}]
  %s5 = inlined_call_operand.vmem [shape: f32[2,16,256], index: 5, kind: output, shape index: {}]
  %s6 = sld [smem:[#allocation0]]
  $region57: #{sep_conv2d.1} parent=0
    _
  %s8 = ssub.s32 1, %s6
  %s9 = scalar_select 0, %s8, %s6
  $region1: #{sep_conv2d.1} parent=0
    #allocation3 [shape = 'u8[131072]{0}', space=vmem, size = 0x20000, scoped, tag = 'input window, operand 0']
    #allocation4 [shape = 's32[2]{0}', space=sflag, size = 0x8, scoped, tag = 'scoped memory for sep_conv2d.1']
    %10 = vsyncpa [#allocation4], 0
    %s11 = scalar_lea.sflag [#allocation4], 1
    %12 = vsyncpa %s11, 0
    loop: start=0, step=1, limit=4
    $region2: #{sep_conv2d.1} parent=1 // loop_pre_header
      _
    $region3: #{sep_conv2d.1} parent=1 // loop_header
      %s14 = sphi 0, %s18
      %p15 = scmp.ge.s32.totalorder %s14, 4
      %s24 = sphi 0, %s26
      %s27 = sphi 0, %s24
      %s28 = sphi 0, %s27
      %s44 = sphi 0, %s28
      %s48 = sphi 0, %s48
      %s50 = sphi 0, %s48
      %s51 = sphi 0, %s50
      %s65 = sphi 0, %s51
      %s69 = sphi 0, %s69
      %s71 = sphi 0, %s69
      %s72 = sphi 0, %s71
      %s86 = sphi 0, %s72
      %s90 = sphi 0, %s90
      %s92 = sphi 0, %s90
      %s93 = sphi 0, %s92
      %s107 = sphi 0, %s93
      %s111 = sphi 0, %s111
      %s113 = sphi 0, %s111
      %s114 = sphi 0, %s113
      %s128 = sphi 0, %s114
      %s134 = sphi 0, %s136
      %s137 = sphi 0, %s134
      %s138 = sphi 0, %s137
      %s154 = sphi 0, %s138
    $region4: #{sep_conv2d.1} parent=1 // loop_header_branch
      %17 = sbr.rel (%p15) target = $region8
    $region5: #{sep_conv2d.1} parent=1 // loop_body
      %s19 = ssub.s32 %s14, 1
      %s20 = ssub.s32 %s14, 2
      %s21 = sadd.s32 %s14, 1
      %s22 = ssub.s32 %s14, %s21
      %p23 = scmp.eq.s32.totalorder %s22, 0
      %s25 = sadd.s32 %s24, 1
      %s26 = scalar_select %p23, %s24, %s25
      %p29 = pneg %p23
      %p30 = scmp.eq.s32.totalorder %s14, 1
      %p31 = por %p29, %p30
      %p32 = scmp.ne.s32.totalorder %s24, %s27
      %p33 = scmp.eq.s32.totalorder %s14, 0
      %p34 = por %p32, %p33
      %p35 = scmp.ne.s32.totalorder %s24, %s27
      %p36 = scmp.eq.s32.totalorder %s19, 1
      %p37 = por %p35, %p36
      %p38 = scmp.ne.s32.totalorder %s27, %s28
      %p39 = scmp.eq.s32.totalorder %s19, 0
      %p40 = por %p38, %p39
      %p41 = scmp.ne.s32.totalorder %s27, %s28
      %p42 = scmp.eq.s32.totalorder %s20, 1
      %p43 = por %p41, %p42
      %p45 = scmp.ne.s32.totalorder %s28, %s44
      %p46 = scmp.eq.s32.totalorder %s20, 0
      %p47 = por %p45, %p46
      %s49 = sadd.s32 %s48, 1
      %p52 = scmp.eq.s32.totalorder %s14, 1
      %p53 = scmp.ne.s32.totalorder %s48, %s50
      %p54 = scmp.eq.s32.totalorder %s14, 0
      %p55 = por %p53, %p54
      %p56 = scmp.ne.s32.totalorder %s48, %s50
      %p57 = scmp.eq.s32.totalorder %s19, 1
      %p58 = por %p56, %p57
      %p59 = scmp.ne.s32.totalorder %s50, %s51
      %p60 = scmp.eq.s32.totalorder %s19, 0
      %p61 = por %p59, %p60
      %p62 = scmp.ne.s32.totalorder %s50, %s51
      %p63 = scmp.eq.s32.totalorder %s20, 1
      %p64 = por %p62, %p63
      %p66 = scmp.ne.s32.totalorder %s51, %s65
      %p67 = scmp.eq.s32.totalorder %s20, 0
      %p68 = por %p66, %p67
      %s70 = sadd.s32 %s69, 1
      %p73 = scmp.eq.s32.totalorder %s14, 1
      %p74 = scmp.ne.s32.totalorder %s69, %s71
      %p75 = scmp.eq.s32.totalorder %s14, 0
      %p76 = por %p74, %p75
      %p77 = scmp.ne.s32.totalorder %s69, %s71
      %p78 = scmp.eq.s32.totalorder %s19, 1
      %p79 = por %p77, %p78
      %p80 = scmp.ne.s32.totalorder %s71, %s72
      %p81 = scmp.eq.s32.totalorder %s19, 0
      %p82 = por %p80, %p81
      %p83 = scmp.ne.s32.totalorder %s71, %s72
      %p84 = scmp.eq.s32.totalorder %s20, 1
      %p85 = por %p83, %p84
      %p87 = scmp.ne.s32.totalorder %s72, %s86
      %p88 = scmp.eq.s32.totalorder %s20, 0
      %p89 = por %p87, %p88
      %s91 = sadd.s32 %s90, 1
      %p94 = scmp.eq.s32.totalorder %s14, 1
      %p95 = scmp.ne.s32.totalorder %s90, %s92
      %p96 = scmp.eq.s32.totalorder %s14, 0
      %p97 = por %p95, %p96
      %p98 = scmp.ne.s32.totalorder %s90, %s92
      %p99 = scmp.eq.s32.totalorder %s19, 1
      %p100 = por %p98, %p99
      %p101 = scmp.ne.s32.totalorder %s92, %s93
      %p102 = scmp.eq.s32.totalorder %s19, 0
      %p103 = por %p101, %p102
      %p104 = scmp.ne.s32.totalorder %s92, %s93
      %p105 = scmp.eq.s32.totalorder %s20, 1
      %p106 = por %p104, %p105
      %p108 = scmp.ne.s32.totalorder %s93, %s107
      %p109 = scmp.eq.s32.totalorder %s20, 0
      %p110 = por %p108, %p109
      %s112 = sadd.s32 %s111, 1
      %p115 = scmp.eq.s32.totalorder %s14, 1
      %p116 = scmp.ne.s32.totalorder %s111, %s113
      %p117 = scmp.eq.s32.totalorder %s14, 0
      %p118 = por %p116, %p117
      %p119 = scmp.ne.s32.totalorder %s111, %s113
      %p120 = scmp.eq.s32.totalorder %s19, 1
      %p121 = por %p119, %p120
      %p122 = scmp.ne.s32.totalorder %s113, %s114
      %p123 = scmp.eq.s32.totalorder %s19, 0
      %p124 = por %p122, %p123
      %p125 = scmp.ne.s32.totalorder %s113, %s114
      %p126 = scmp.eq.s32.totalorder %s20, 1
      %p127 = por %p125, %p126
      %p129 = scmp.ne.s32.totalorder %s114, %s128
      %p130 = scmp.eq.s32.totalorder %s20, 0
      %p131 = por %p129, %p130
      %s132 = ssub.s32 %s14, %s21
      %p133 = scmp.eq.s32.totalorder %s132, 0
      %s135 = sadd.s32 %s134, 1
      %s136 = scalar_select %p133, %s134, %s135
      %p139 = pneg %p133
      %p140 = scmp.eq.s32.totalorder %s14, 1
      %p141 = por %p139, %p140
      %p142 = scmp.ne.s32.totalorder %s134, %s137
      %p143 = scmp.eq.s32.totalorder %s14, 0
      %p144 = por %p142, %p143
      %p145 = scmp.ne.s32.totalorder %s134, %s137
      %p146 = scmp.eq.s32.totalorder %s19, 1
      %p147 = por %p145, %p146
      %p148 = scmp.ne.s32.totalorder %s137, %s138
      %p149 = scmp.eq.s32.totalorder %s19, 0
      %p150 = por %p148, %p149
      %p151 = scmp.ne.s32.totalorder %s137, %s138
      %p152 = scmp.eq.s32.totalorder %s20, 1
      %p153 = por %p151, %p152
      %p155 = scmp.ne.s32.totalorder %s138, %s154
      %p156 = scmp.eq.s32.totalorder %s20, 0
      %p157 = por %p155, %p156
      %p158 = scmp.le.s32.totalorder 1, %s14
      %p159 = scmp.lt.s32.totalorder %s14, 3
      %p160 = pnand %p158, %p159
      %p161 = pneg %p160
      // Predicated region
      $region9: #{sep_conv2d.1} parent=5 // pred_check
        _
      $region10: #{sep_conv2d.1} parent=5 // pred_check_branch
        %163 = sbr.rel (%p160) target = $region12
      $region11: #{sep_conv2d.1} parent=5 // pred_region
        %s164 = ssub.s32 %s14, 1
        // Predicated region
        $region13: #{sep_conv2d.1} parent=11 // pred_check
          %p165 = pneg %p61
        $region14: #{sep_conv2d.1} parent=11 // pred_check_branch
          %167 = sbr.rel (%p165) target = $region16
        $region15: #{sep_conv2d.1} parent=11 // pred_region
          _
        $region16: #{sep_conv2d.1} parent=11 // pred_fallthru
          _
        // Predicated region
        $region17: #{sep_conv2d.1} parent=11 // pred_check
          %p168 = pneg %p82
        $region18: #{sep_conv2d.1} parent=11 // pred_check_branch
          %170 = sbr.rel (%p168) target = $region20
        $region19: #{sep_conv2d.1} parent=11 // pred_region
          _
        $region20: #{sep_conv2d.1} parent=11 // pred_fallthru
          _
        // Predicated region
        $region21: #{sep_conv2d.1} parent=11 // pred_check
          %p171 = pneg %p103
        $region22: #{sep_conv2d.1} parent=11 // pred_check_branch
          %173 = sbr.rel (%p171) target = $region24
        $region23: #{sep_conv2d.1} parent=11 // pred_region
          _
        $region24: #{sep_conv2d.1} parent=11 // pred_fallthru
          _
        // Predicated region
        $region25: #{sep_conv2d.1} parent=11 // pred_check
          %p174 = pneg %p124
        $region26: #{sep_conv2d.1} parent=11 // pred_check_branch
          %176 = sbr.rel (%p174) target = $region28
        $region27: #{sep_conv2d.1} parent=11 // pred_region
          _
        $region28: #{sep_conv2d.1} parent=11 // pred_fallthru
          _
      $region12: #{sep_conv2d.1} parent=5 // pred_fallthru
        _
      %p177 = scmp.lt.s32.totalorder %s14, 2
      // Predicated region
      $region29: #{sep_conv2d.1} parent=5 // pred_check
        %p178 = pneg %p177
      $region30: #{sep_conv2d.1} parent=5 // pred_check_branch
        %180 = sbr.rel (%p178) target = $region32
      $region31: #{sep_conv2d.1} parent=5 // pred_region
        // Predicated region
        $region33: #{sep_conv2d.1} parent=31 // pred_check
          %p181 = pneg %p34
        $region34: #{sep_conv2d.1} parent=31 // pred_check_branch
          %183 = sbr.rel (%p181) target = $region36
        $region35: #{sep_conv2d.1} parent=31 // pred_region
          %s184 = sand.u32 %s24, 1
          %s185 = scalar_lea.sflag [#allocation4], %s184
          %s186 = sand.u32 %s24, 1
          %s187 = smul.addr %s186, 128
          %s188 = scalar_lea.vmem [#allocation3], %s187
          %s190 = ssub.s32 2048, 2048
          %191 = vsyncadd %s185, %s190
          %s192 = smul.addr %s14, 16
          %s193 = smul.addr %s192, 128
          %s194 = scalar_lea.hbm %s0, %s193
          %s195 = sshll.u32 %s188, 4
          %s196 = int_to_ptr.vmem [resolvable:$true] %s195
          %201 = dma.hbm_to_vmem [thread:$0]  %s194, 2048, %s196, %s185, 128, 128, 8
        $region36: #{sep_conv2d.1} parent=31 // pred_fallthru
          _
      $region32: #{sep_conv2d.1} parent=5 // pred_fallthru
        _
      %p202 = scmp.le.s32.totalorder 1, %s14
      %p203 = scmp.lt.s32.totalorder %s14, 3
      %p204 = pnand %p202, %p203
      %p205 = pneg %p204
      // Predicated region
      $region37: #{sep_conv2d.1} parent=5 // pred_check
        _
      $region38: #{sep_conv2d.1} parent=5 // pred_check_branch
        %207 = sbr.rel (%p204) target = $region40
      $region39: #{sep_conv2d.1} parent=5 // pred_region
        %s208 = ssub.s32 %s14, 1
        %s209 = sand.u32 %s27, 1
        %s210 = scalar_lea.sflag [#allocation4], %s209
        %s211 = sand.u32 %s27, 1
        %s212 = smul.addr %s211, 128
        %s213 = scalar_lea.vmem [#allocation3], %s212
        // Predicated region
        $region41: #{sep_conv2d.1} parent=39 // pred_check
          %p214 = pneg %p40
        $region42: #{sep_conv2d.1} parent=39 // pred_check_branch
          %216 = sbr.rel (%p214) target = $region44
        $region43: #{sep_conv2d.1} parent=39 // pred_region
          %217 = dma.done %s210, 2048
        $region44: #{sep_conv2d.1} parent=39 // pred_fallthru
          _
        %s218 = sand.u32 %s27, 1
        %s219 = scalar_lea.sflag [#allocation4], %s218
        %s220 = sand.u32 %s27, 1
        %s221 = smul.addr %s220, 128
        %s222 = scalar_lea.vmem [#allocation3], %s221
        %p223 = pneg %p40
        %p224 = pneg %p37
        %p225 = pneg %p61
        %p226 = pneg %p58
        %p227 = pneg %p82
        %p228 = pneg %p79
        %p229 = pneg %p103
        %p230 = pneg %p100
        %p231 = pneg %p124
        %p232 = pneg %p121
        %p233 = pneg %p150
        %p234 = pneg %p147
        %p235 = scmp.lt.s32.totalorder %s19, 1
        %s236 = scalar_select %p235, %s19, 1
        %s237 = smul.addr %s236, 4
        %s238 = smul.addr %s237, 8
        %s239 = scalar_lea.vmem %s5, %s238
        %p240 = scmp.lt.s32.totalorder %s19, 1
        %s241 = scalar_select %p240, %s19, 1
        %s242 = smul.addr %s241, 4
        %s243 = smul.addr %s242, 8
        %s244 = scalar_lea.vmem %s5, %s243
        %vm245 = vcmask 146432
        %246 = vst.msk [vmem:[#allocation2] sm:$0xff] %vm245, 0.0
        %247 = vst.msk [vmem:[#allocation2 + $0x8] sm:$0xff] %vm245, 0.0
        %vm248 = vcmask 140288
        %249 = vst.msk [vmem:[#allocation2 + $0x10] sm:$0x3] %vm248, 0.0
        %250 = vst.msk [vmem:[#allocation2 + $0x18] sm:$0xff] %vm245, 0.0
        %251 = vst.msk [vmem:[#allocation2 + $0x20] sm:$0xff] %vm245, 0.0
        %252 = vst.msk [vmem:[#allocation2 + $0x28] sm:$0x3] %vm248, 0.0
        %253 = vst.msk [vmem:[#allocation2 + $0x30] sm:$0xff] %vm245, 0.0
        %254 = vst.msk [vmem:[#allocation2 + $0x38] sm:$0xff] %vm245, 0.0
        %255 = vst.msk [vmem:[#allocation2 + $0x40] sm:$0x3] %vm248, 0.0
        %256 = vst.msk [vmem:[#allocation2 + $0x48] sm:$0xff] %vm245, 0.0
        %257 = vst.msk [vmem:[#allocation2 + $0x50] sm:$0xff] %vm245, 0.0
        %258 = vst.msk [vmem:[#allocation2 + $0x58] sm:$0x3] %vm248, 0.0
        %259 = vst.msk [vmem:[#allocation2 + $0x60] sm:$0xff] %vm245, 0.0
        %260 = vst.msk [vmem:[#allocation2 + $0x68] sm:$0xff] %vm245, 0.0
        %261 = vst.msk [vmem:[#allocation2 + $0x70] sm:$0x3] %vm248, 0.0
        %262 = vst.msk [vmem:[#allocation2 + $0x78] sm:$0xff] %vm245, 0.0
        %263 = vst.msk [vmem:[#allocation2 + $0x80] sm:$0xff] %vm245, 0.0
        %264 = vst.msk [vmem:[#allocation2 + $0x88] sm:$0x3] %vm248, 0.0
        %265 = vst.msk [vmem:[#allocation2 + $0x90] sm:$0xff] %vm245, 0.0
        %266 = vst.msk [vmem:[#allocation2 + $0x98] sm:$0xff] %vm245, 0.0
        %267 = vst.msk [vmem:[#allocation2 + $0xa0] sm:$0x3] %vm248, 0.0
        %268 = vst.msk [vmem:[#allocation2 + $0xa8] sm:$0xff] %vm245, 0.0
        %269 = vst.msk [vmem:[#allocation2 + $0xb0] sm:$0xff] %vm245, 0.0
        %270 = vst.msk [vmem:[#allocation2 + $0xb8] sm:$0x3] %vm248, 0.0
        %v271 = vld [vmem:[%s213] sm:$0xff]
        %v272 = vld [vmem:[%s213 + $0x8] sm:$0xff]
        %v273 = vld [vmem:[%s213 + $0x10] sm:$0xff]
        %v274 = vld [vmem:[%s213 + $0x18] sm:$0xff]
        %v275 = vld [vmem:[%s213 + $0x20] sm:$0xff]
        %v276 = vld [vmem:[%s213 + $0x28] sm:$0xff]
        %v277 = vld [vmem:[%s213 + $0x30] sm:$0xff]
        %v278 = vld [vmem:[%s213 + $0x38] sm:$0xff]
        %v279 = vld [vmem:[%s213 + $0x40] sm:$0xff]
        %v280 = vld [vmem:[%s213 + $0x48] sm:$0xff]
        %v281 = vld [vmem:[%s213 + $0x50] sm:$0xff]
        %v282 = vld [vmem:[%s213 + $0x58] sm:$0xff]
        %v283 = vld [vmem:[%s213 + $0x60] sm:$0xff]
        %v284 = vld [vmem:[%s213 + $0x68] sm:$0xff]
        %v285 = vld [vmem:[%s213 + $0x70] sm:$0xff]
        %v286 = vld [vmem:[%s213 + $0x78] sm:$0xff]
        %303 = vrot.lane.b32.xlu0 %v271, 1
        %v304 = vpop.permute.xlu0 %303
        %305 = vrot.lane.b32.xlu0 %v272, 1
        %v306 = vpop.permute.xlu0 %305
        %307 = vrot.lane.b32.xlu0 %v273, 1
        %v308 = vpop.permute.xlu0 %307
        %309 = vrot.lane.b32.xlu0 %v274, 1
        %v310 = vpop.permute.xlu0 %309
        %311 = vrot.lane.b32.xlu0 %v275, 1
        %v312 = vpop.permute.xlu0 %311
        %313 = vrot.lane.b32.xlu0 %v276, 1
        %v314 = vpop.permute.xlu0 %313
        %315 = vrot.lane.b32.xlu0 %v277, 1
        %v316 = vpop.permute.xlu0 %315
        %317 = vrot.lane.b32.xlu0 %v278, 1
        %v318 = vpop.permute.xlu0 %317
        %319 = vrot.lane.b32.xlu0 %v279, 1
        %v320 = vpop.permute.xlu0 %319
        %321 = vrot.lane.b32.xlu0 %v280, 1
        %v322 = vpop.permute.xlu0 %321
        %323 = vrot.lane.b32.xlu0 %v281, 1
        %v324 = vpop.permute.xlu0 %323
        %325 = vrot.lane.b32.xlu0 %v282, 1
        %v326 = vpop.permute.xlu0 %325
        %327 = vrot.lane.b32.xlu0 %v283, 1
        %v328 = vpop.permute.xlu0 %327
        %329 = vrot.lane.b32.xlu0 %v284, 1
        %v330 = vpop.permute.xlu0 %329
        %331 = vrot.lane.b32.xlu0 %v285, 1
        %v332 = vpop.permute.xlu0 %331
        %333 = vrot.lane.b32.xlu0 %v286, 1
        %v334 = vpop.permute.xlu0 %333
        %vm351 = vcmask 138248
        %352 = vst.msk [vmem:[#allocation2 + $0x1] sm:$0xff] %vm351, %v304
        %353 = vst.msk [vmem:[#allocation2 + $0x9] sm:$0xff] %vm351, %v306
        %354 = vst.msk [vmem:[#allocation2 + $0x19] sm:$0xff] %vm351, %v308
        %355 = vst.msk [vmem:[#allocation2 + $0x21] sm:$0xff] %vm351, %v310
        %356 = vst.msk [vmem:[#allocation2 + $0x31] sm:$0xff] %vm351, %v312
        %357 = vst.msk [vmem:[#allocation2 + $0x39] sm:$0xff] %vm351, %v314
        %358 = vst.msk [vmem:[#allocation2 + $0x49] sm:$0xff] %vm351, %v316
        %359 = vst.msk [vmem:[#allocation2 + $0x51] sm:$0xff] %vm351, %v318
        %360 = vst.msk [vmem:[#allocation2 + $0x61] sm:$0xff] %vm351, %v320
        %361 = vst.msk [vmem:[#allocation2 + $0x69] sm:$0xff] %vm351, %v322
        %362 = vst.msk [vmem:[#allocation2 + $0x79] sm:$0xff] %vm351, %v324
        %363 = vst.msk [vmem:[#allocation2 + $0x81] sm:$0xff] %vm351, %v326
        %364 = vst.msk [vmem:[#allocation2 + $0x91] sm:$0xff] %vm351, %v328
        %365 = vst.msk [vmem:[#allocation2 + $0x99] sm:$0xff] %vm351, %v330
        %366 = vst.msk [vmem:[#allocation2 + $0xa9] sm:$0xff] %vm351, %v332
        %367 = vst.msk [vmem:[#allocation2 + $0xb1] sm:$0xff] %vm351, %v334
        %v368 = vld [vmem:[#allocation2] sm:$0xff]
        %v369 = vld [vmem:[#allocation2 + $0x8] sm:$0xff]
        %v370 = vld [vmem:[#allocation2 + $0x18] sm:$0xff]
        %v371 = vld [vmem:[#allocation2 + $0x20] sm:$0xff]
        %v372 = vld [vmem:[#allocation2 + $0x30] sm:$0xff]
        %v373 = vld [vmem:[#allocation2 + $0x38] sm:$0xff]
        %v374 = vld [vmem:[#allocation2 + $0x48] sm:$0xff]
        %v375 = vld [vmem:[#allocation2 + $0x50] sm:$0xff]
        %v376 = vld [vmem:[#allocation2 + $0x60] sm:$0xff]
        %v377 = vld [vmem:[#allocation2 + $0x68] sm:$0xff]
        %v378 = vld [vmem:[#allocation2 + $0x78] sm:$0xff]
        %v379 = vld [vmem:[#allocation2 + $0x80] sm:$0xff]
        %v380 = vld [vmem:[#allocation2 + $0x90] sm:$0xff]
        %v381 = vld [vmem:[#allocation2 + $0x98] sm:$0xff]
        %v382 = vld [vmem:[#allocation2 + $0xa8] sm:$0xff]
        %v383 = vld [vmem:[#allocation2 + $0xb0] sm:$0xff]
        %v384 = vld [vmem:[%s1] sm:$0x1]
        %v385 = vld [vmem:[%s1 + $0x1] sm:$0x1]
        %v386 = vld [vmem:[%s1 + $0x2] sm:$0x1]
        %v387 = vld [vmem:[%s1 + $0x3] sm:$0x1]
        %v388 = vld [vmem:[%s1 + $0x4] sm:$0x1]
        %v389 = vld [vmem:[%s1 + $0x5] sm:$0x1]
        %v390 = vld [vmem:[%s1 + $0x6] sm:$0x1]
        %v391 = vld [vmem:[%s1 + $0x7] sm:$0x1]
        %v400 = vlaneseq
        %v401 = vshrl.u32 %v400, 7
        %v402 = vsub.s32 0, %v401
        %v403 = vrot.slane %v384, %v402
        %v404 = vlaneseq
        %v405 = vshrl.u32 %v404, 7
        %v406 = vsub.s32 0, %v405
        %v407 = vrot.slane %v385, %v406
        %v408 = vlaneseq
        %v409 = vshrl.u32 %v408, 7
        %v410 = vsub.s32 0, %v409
        %v411 = vrot.slane %v386, %v410
        %v412 = vlaneseq
        %v413 = vshrl.u32 %v412, 7
        %v414 = vsub.s32 0, %v413
        %v415 = vrot.slane %v387, %v414
        %v416 = vlaneseq
        %v417 = vshrl.u32 %v416, 7
        %v418 = vsub.s32 0, %v417
        %v419 = vrot.slane %v388, %v418
        %v420 = vlaneseq
        %v421 = vshrl.u32 %v420, 7
        %v422 = vsub.s32 0, %v421
        %v423 = vrot.slane %v389, %v422
        %v424 = vlaneseq
        %v425 = vshrl.u32 %v424, 7
        %v426 = vsub.s32 0, %v425
        %v427 = vrot.slane %v390, %v426
        %v428 = vlaneseq
        %v429 = vshrl.u32 %v428, 7
        %v430 = vsub.s32 0, %v429
        %v431 = vrot.slane %v391, %v430
        %432 = vset.pattern.permute.xlu0 0
        %433 = vperm.xlu0 %432, %v403
        %v434 = vpop.permute.xlu0 %433
        %436 = vset.pattern.permute.xlu0 0
        %437 = vperm.xlu0 %436, %v407
        %v438 = vpop.permute.xlu0 %437
        %440 = vset.pattern.permute.xlu0 0
        %441 = vperm.xlu0 %440, %v411
        %v442 = vpop.permute.xlu0 %441
        %444 = vset.pattern.permute.xlu0 0
        %445 = vperm.xlu0 %444, %v415
        %v446 = vpop.permute.xlu0 %445
        %448 = vset.pattern.permute.xlu0 0
        %449 = vperm.xlu0 %448, %v419
        %v450 = vpop.permute.xlu0 %449
        %452 = vset.pattern.permute.xlu0 0
        %453 = vperm.xlu0 %452, %v423
        %v454 = vpop.permute.xlu0 %453
        %456 = vset.pattern.permute.xlu0 0
        %457 = vperm.xlu0 %456, %v427
        %v458 = vpop.permute.xlu0 %457
        %460 = vset.pattern.permute.xlu0 0
        %461 = vperm.xlu0 %460, %v431
        %v462 = vpop.permute.xlu0 %461
        %v464 = vmul.f32 %v368, %v434
        %v465 = vmul.f32 %v369, %v434
        %v466 = vmul.f32 %v370, %v438
        %v467 = vmul.f32 %v371, %v438
        %v468 = vmul.f32 %v372, %v442
        %v469 = vmul.f32 %v373, %v442
        %v470 = vmul.f32 %v374, %v446
        %v471 = vmul.f32 %v375, %v446
        %v472 = vmul.f32 %v376, %v450
        %v473 = vmul.f32 %v377, %v450
        %v474 = vmul.f32 %v378, %v454
        %v475 = vmul.f32 %v379, %v454
        %v476 = vmul.f32 %v380, %v458
        %v477 = vmul.f32 %v381, %v458
        %v478 = vmul.f32 %v382, %v462
        %v479 = vmul.f32 %v383, %v462
        %v480 = vadd.f32 %v464, 0.0
        %v481 = vadd.f32 %v465, 0.0
        %v482 = vadd.f32 %v466, 0.0
        %v483 = vadd.f32 %v467, 0.0
        %v484 = vadd.f32 %v468, 0.0
        %v485 = vadd.f32 %v469, 0.0
        %v486 = vadd.f32 %v470, 0.0
        %v487 = vadd.f32 %v471, 0.0
        %v488 = vadd.f32 %v472, 0.0
        %v489 = vadd.f32 %v473, 0.0
        %v490 = vadd.f32 %v474, 0.0
        %v491 = vadd.f32 %v475, 0.0
        %v492 = vadd.f32 %v476, 0.0
        %v493 = vadd.f32 %v477, 0.0
        %v494 = vadd.f32 %v478, 0.0
        %v495 = vadd.f32 %v479, 0.0
        %s496 = scalar_lea.vmem %s1, 8
        %v497 = vld [vmem:[%s496] sm:$0x1]
        %v498 = vld [vmem:[%s496 + $0x1] sm:$0x1]
        %v499 = vld [vmem:[%s496 + $0x2] sm:$0x1]
        %v500 = vld [vmem:[%s496 + $0x3] sm:$0x1]
        %v501 = vld [vmem:[%s496 + $0x4] sm:$0x1]
        %v502 = vld [vmem:[%s496 + $0x5] sm:$0x1]
        %v503 = vld [vmem:[%s496 + $0x6] sm:$0x1]
        %v504 = vld [vmem:[%s496 + $0x7] sm:$0x1]
        %v513 = vlaneseq
        %v514 = vshrl.u32 %v513, 7
        %v515 = vsub.s32 0, %v514
        %v516 = vrot.slane %v497, %v515
        %v517 = vlaneseq
        %v518 = vshrl.u32 %v517, 7
        %v519 = vsub.s32 0, %v518
        %v520 = vrot.slane %v498, %v519
        %v521 = vlaneseq
        %v522 = vshrl.u32 %v521, 7
        %v523 = vsub.s32 0, %v522
        %v524 = vrot.slane %v499, %v523
        %v525 = vlaneseq
        %v526 = vshrl.u32 %v525, 7
        %v527 = vsub.s32 0, %v526
        %v528 = vrot.slane %v500, %v527
        %v529 = vlaneseq
        %v530 = vshrl.u32 %v529, 7
        %v531 = vsub.s32 0, %v530
        %v532 = vrot.slane %v501, %v531
        %v533 = vlaneseq
        %v534 = vshrl.u32 %v533, 7
        %v535 = vsub.s32 0, %v534
        %v536 = vrot.slane %v502, %v535
        %v537 = vlaneseq
        %v538 = vshrl.u32 %v537, 7
        %v539 = vsub.s32 0, %v538
        %v540 = vrot.slane %v503, %v539
        %v541 = vlaneseq
        %v542 = vshrl.u32 %v541, 7
        %v543 = vsub.s32 0, %v542
        %v544 = vrot.slane %v504, %v543
        %545 = vset.pattern.permute.xlu0 0
        %546 = vperm.xlu0 %545, %v516
        %v547 = vpop.permute.xlu0 %546
        %549 = vset.pattern.permute.xlu0 0
        %550 = vperm.xlu0 %549, %v520
        %v551 = vpop.permute.xlu0 %550
        %553 = vset.pattern.permute.xlu0 0
        %554 = vperm.xlu0 %553, %v524
        %v555 = vpop.permute.xlu0 %554
        %557 = vset.pattern.permute.xlu0 0
        %558 = vperm.xlu0 %557, %v528
        %v559 = vpop.permute.xlu0 %558
        %561 = vset.pattern.permute.xlu0 0
        %562 = vperm.xlu0 %561, %v532
        %v563 = vpop.permute.xlu0 %562
        %565 = vset.pattern.permute.xlu0 0
        %566 = vperm.xlu0 %565, %v536
        %v567 = vpop.permute.xlu0 %566
        %569 = vset.pattern.permute.xlu0 0
        %570 = vperm.xlu0 %569, %v540
        %v571 = vpop.permute.xlu0 %570
        %573 = vset.pattern.permute.xlu0 0
        %574 = vperm.xlu0 %573, %v544
        %v575 = vpop.permute.xlu0 %574
        %v577 = vmul.f32 %v368, %v547
        %v578 = vmul.f32 %v369, %v547
        %v579 = vmul.f32 %v370, %v551
        %v580 = vmul.f32 %v371, %v551
        %v581 = vmul.f32 %v372, %v555
        %v582 = vmul.f32 %v373, %v555
        %v583 = vmul.f32 %v374, %v559
        %v584 = vmul.f32 %v375, %v559
        %v585 = vmul.f32 %v376, %v563
        %v586 = vmul.f32 %v377, %v563
        %v587 = vmul.f32 %v378, %v567
        %v588 = vmul.f32 %v379, %v567
        %v589 = vmul.f32 %v380, %v571
        %v590 = vmul.f32 %v381, %v571
        %v591 = vmul.f32 %v382, %v575
        %v592 = vmul.f32 %v383, %v575
        %609 = vrot.lane.b32.xlu0 %v577, 127
        %v610 = vpop.permute.xlu0 %609
        %611 = vrot.lane.b32.xlu0 %v578, 127
        %v612 = vpop.permute.xlu0 %611
        %613 = vrot.lane.b32.xlu0 %v579, 127
        %v614 = vpop.permute.xlu0 %613
        %615 = vrot.lane.b32.xlu0 %v580, 127
        %v616 = vpop.permute.xlu0 %615
        %617 = vrot.lane.b32.xlu0 %v581, 127
        %v618 = vpop.permute.xlu0 %617
        %619 = vrot.lane.b32.xlu0 %v582, 127
        %v620 = vpop.permute.xlu0 %619
        %621 = vrot.lane.b32.xlu0 %v583, 127
        %v622 = vpop.permute.xlu0 %621
        %623 = vrot.lane.b32.xlu0 %v584, 127
        %v624 = vpop.permute.xlu0 %623
        %625 = vrot.lane.b32.xlu0 %v585, 127
        %v626 = vpop.permute.xlu0 %625
        %627 = vrot.lane.b32.xlu0 %v586, 127
        %v628 = vpop.permute.xlu0 %627
        %629 = vrot.lane.b32.xlu0 %v587, 127
        %v630 = vpop.permute.xlu0 %629
        %631 = vrot.lane.b32.xlu0 %v588, 127
        %v632 = vpop.permute.xlu0 %631
        %633 = vrot.lane.b32.xlu0 %v589, 127
        %v634 = vpop.permute.xlu0 %633
        %635 = vrot.lane.b32.xlu0 %v590, 127
        %v636 = vpop.permute.xlu0 %635
        %637 = vrot.lane.b32.xlu0 %v591, 127
        %v638 = vpop.permute.xlu0 %637
        %639 = vrot.lane.b32.xlu0 %v592, 127
        %v640 = vpop.permute.xlu0 %639
        %v657 = vadd.f32 %v480, %v610
        %v658 = vadd.f32 %v481, %v612
        %v659 = vadd.f32 %v482, %v614
        %v660 = vadd.f32 %v483, %v616
        %v661 = vadd.f32 %v484, %v618
        %v662 = vadd.f32 %v485, %v620
        %v663 = vadd.f32 %v486, %v622
        %v664 = vadd.f32 %v487, %v624
        %v665 = vadd.f32 %v488, %v626
        %v666 = vadd.f32 %v489, %v628
        %v667 = vadd.f32 %v490, %v630
        %v668 = vadd.f32 %v491, %v632
        %v669 = vadd.f32 %v492, %v634
        %v670 = vadd.f32 %v493, %v636
        %v671 = vadd.f32 %v494, %v638
        %v672 = vadd.f32 %v495, %v640
        %s673 = scalar_lea.vmem %s1, 16
        %v674 = vld [vmem:[%s673] sm:$0x1]
        %v675 = vld [vmem:[%s673 + $0x1] sm:$0x1]
        %v676 = vld [vmem:[%s673 + $0x2] sm:$0x1]
        %v677 = vld [vmem:[%s673 + $0x3] sm:$0x1]
        %v678 = vld [vmem:[%s673 + $0x4] sm:$0x1]
        %v679 = vld [vmem:[%s673 + $0x5] sm:$0x1]
        %v680 = vld [vmem:[%s673 + $0x6] sm:$0x1]
        %v681 = vld [vmem:[%s673 + $0x7] sm:$0x1]
        %v690 = vlaneseq
        %v691 = vshrl.u32 %v690, 7
        %v692 = vsub.s32 0, %v691
        %v693 = vrot.slane %v674, %v692
        %v694 = vlaneseq
        %v695 = vshrl.u32 %v694, 7
        %v696 = vsub.s32 0, %v695
        %v697 = vrot.slane %v675, %v696
        %v698 = vlaneseq
        %v699 = vshrl.u32 %v698, 7
        %v700 = vsub.s32 0, %v699
        %v701 = vrot.slane %v676, %v700
        %v702 = vlaneseq
        %v703 = vshrl.u32 %v702, 7
        %v704 = vsub.s32 0, %v703
        %v705 = vrot.slane %v677, %v704
        %v706 = vlaneseq
        %v707 = vshrl.u32 %v706, 7
        %v708 = vsub.s32 0, %v707
        %v709 = vrot.slane %v678, %v708
        %v710 = vlaneseq
        %v711 = vshrl.u32 %v710, 7
        %v712 = vsub.s32 0, %v711
        %v713 = vrot.slane %v679, %v712
        %v714 = vlaneseq
        %v715 = vshrl.u32 %v714, 7
        %v716 = vsub.s32 0, %v715
        %v717 = vrot.slane %v680, %v716
        %v718 = vlaneseq
        %v719 = vshrl.u32 %v718, 7
        %v720 = vsub.s32 0, %v719
        %v721 = vrot.slane %v681, %v720
        %722 = vset.pattern.permute.xlu0 0
        %723 = vperm.xlu0 %722, %v693
        %v724 = vpop.permute.xlu0 %723
        %726 = vset.pattern.permute.xlu0 0
        %727 = vperm.xlu0 %726, %v697
        %v728 = vpop.permute.xlu0 %727
        %730 = vset.pattern.permute.xlu0 0
        %731 = vperm.xlu0 %730, %v701
        %v732 = vpop.permute.xlu0 %731
        %734 = vset.pattern.permute.xlu0 0
        %735 = vperm.xlu0 %734, %v705
        %v736 = vpop.permute.xlu0 %735
        %738 = vset.pattern.permute.xlu0 0
        %739 = vperm.xlu0 %738, %v709
        %v740 = vpop.permute.xlu0 %739
        %742 = vset.pattern.permute.xlu0 0
        %743 = vperm.xlu0 %742, %v713
        %v744 = vpop.permute.xlu0 %743
        %746 = vset.pattern.permute.xlu0 0
        %747 = vperm.xlu0 %746, %v717
        %v748 = vpop.permute.xlu0 %747
        %750 = vset.pattern.permute.xlu0 0
        %751 = vperm.xlu0 %750, %v721
        %v752 = vpop.permute.xlu0 %751
        %v754 = vmul.f32 %v368, %v724
        %v755 = vmul.f32 %v369, %v724
        %v756 = vmul.f32 %v370, %v728
        %v757 = vmul.f32 %v371, %v728
        %v758 = vmul.f32 %v372, %v732
        %v759 = vmul.f32 %v373, %v732
        %v760 = vmul.f32 %v374, %v736
        %v761 = vmul.f32 %v375, %v736
        %v762 = vmul.f32 %v376, %v740
        %v763 = vmul.f32 %v377, %v740
        %v764 = vmul.f32 %v378, %v744
        %v765 = vmul.f32 %v379, %v744
        %v766 = vmul.f32 %v380, %v748
        %v767 = vmul.f32 %v381, %v748
        %v768 = vmul.f32 %v382, %v752
        %v769 = vmul.f32 %v383, %v752
        %786 = vrot.lane.b32.xlu0 %v754, 126
        %v787 = vpop.permute.xlu0 %786
        %788 = vrot.lane.b32.xlu0 %v755, 126
        %v789 = vpop.permute.xlu0 %788
        %790 = vrot.lane.b32.xlu0 %v756, 126
        %v791 = vpop.permute.xlu0 %790
        %792 = vrot.lane.b32.xlu0 %v757, 126
        %v793 = vpop.permute.xlu0 %792
        %794 = vrot.lane.b32.xlu0 %v758, 126
        %v795 = vpop.permute.xlu0 %794
        %796 = vrot.lane.b32.xlu0 %v759, 126
        %v797 = vpop.permute.xlu0 %796
        %798 = vrot.lane.b32.xlu0 %v760, 126
        %v799 = vpop.permute.xlu0 %798
        %800 = vrot.lane.b32.xlu0 %v761, 126
        %v801 = vpop.permute.xlu0 %800
        %802 = vrot.lane.b32.xlu0 %v762, 126
        %v803 = vpop.permute.xlu0 %802
        %804 = vrot.lane.b32.xlu0 %v763, 126
        %v805 = vpop.permute.xlu0 %804
        %806 = vrot.lane.b32.xlu0 %v764, 126
        %v807 = vpop.permute.xlu0 %806
        %808 = vrot.lane.b32.xlu0 %v765, 126
        %v809 = vpop.permute.xlu0 %808
        %810 = vrot.lane.b32.xlu0 %v766, 126
        %v811 = vpop.permute.xlu0 %810
        %812 = vrot.lane.b32.xlu0 %v767, 126
        %v813 = vpop.permute.xlu0 %812
        %814 = vrot.lane.b32.xlu0 %v768, 126
        %v815 = vpop.permute.xlu0 %814
        %816 = vrot.lane.b32.xlu0 %v769, 126
        %v817 = vpop.permute.xlu0 %816
        %v834 = vadd.f32 %v657, %v787
        %v835 = vadd.f32 %v658, %v789
        %v836 = vadd.f32 %v659, %v791
        %v837 = vadd.f32 %v660, %v793
        %v838 = vadd.f32 %v661, %v795
        %v839 = vadd.f32 %v662, %v797
        %v840 = vadd.f32 %v663, %v799
        %v841 = vadd.f32 %v664, %v801
        %v842 = vadd.f32 %v665, %v803
        %v843 = vadd.f32 %v666, %v805
        %v844 = vadd.f32 %v667, %v807
        %v845 = vadd.f32 %v668, %v809
        %v846 = vadd.f32 %v669, %v811
        %v847 = vadd.f32 %v670, %v813
        %v848 = vadd.f32 %v671, %v815
        %v849 = vadd.f32 %v672, %v817
        %v850 = vld [vmem:[#allocation2 + $0x1] sm:$0xff]
        %v851 = vld [vmem:[#allocation2 + $0x9] sm:$0xff]
        %v852 = vld [vmem:[#allocation2 + $0x19] sm:$0xff]
        %v853 = vld [vmem:[#allocation2 + $0x21] sm:$0xff]
        %v854 = vld [vmem:[#allocation2 + $0x31] sm:$0xff]
        %v855 = vld [vmem:[#allocation2 + $0x39] sm:$0xff]
        %v856 = vld [vmem:[#allocation2 + $0x49] sm:$0xff]
        %v857 = vld [vmem:[#allocation2 + $0x51] sm:$0xff]
        %v858 = vld [vmem:[#allocation2 + $0x61] sm:$0xff]
        %v859 = vld [vmem:[#allocation2 + $0x69] sm:$0xff]
        %v860 = vld [vmem:[#allocation2 + $0x79] sm:$0xff]
        %v861 = vld [vmem:[#allocation2 + $0x81] sm:$0xff]
        %v862 = vld [vmem:[#allocation2 + $0x91] sm:$0xff]
        %v863 = vld [vmem:[#allocation2 + $0x99] sm:$0xff]
        %v864 = vld [vmem:[#allocation2 + $0xa9] sm:$0xff]
        %v865 = vld [vmem:[#allocation2 + $0xb1] sm:$0xff]
        %s866 = scalar_lea.vmem %s1, 24
        %v867 = vld [vmem:[%s866] sm:$0x1]
        %v868 = vld [vmem:[%s866 + $0x1] sm:$0x1]
        %v869 = vld [vmem:[%s866 + $0x2] sm:$0x1]
        %v870 = vld [vmem:[%s866 + $0x3] sm:$0x1]
        %v871 = vld [vmem:[%s866 + $0x4] sm:$0x1]
        %v872 = vld [vmem:[%s866 + $0x5] sm:$0x1]
        %v873 = vld [vmem:[%s866 + $0x6] sm:$0x1]
        %v874 = vld [vmem:[%s866 + $0x7] sm:$0x1]
        %v883 = vlaneseq
        %v884 = vshrl.u32 %v883, 7
        %v885 = vsub.s32 0, %v884
        %v886 = vrot.slane %v867, %v885
        %v887 = vlaneseq
        %v888 = vshrl.u32 %v887, 7
        %v889 = vsub.s32 0, %v888
        %v890 = vrot.slane %v868, %v889
        %v891 = vlaneseq
        %v892 = vshrl.u32 %v891, 7
        %v893 = vsub.s32 0, %v892
        %v894 = vrot.slane %v869, %v893
        %v895 = vlaneseq
        %v896 = vshrl.u32 %v895, 7
        %v897 = vsub.s32 0, %v896
        %v898 = vrot.slane %v870, %v897
        %v899 = vlaneseq
        %v900 = vshrl.u32 %v899, 7
        %v901 = vsub.s32 0, %v900
        %v902 = vrot.slane %v871, %v901
        %v903 = vlaneseq
        %v904 = vshrl.u32 %v903, 7
        %v905 = vsub.s32 0, %v904
        %v906 = vrot.slane %v872, %v905
        %v907 = vlaneseq
        %v908 = vshrl.u32 %v907, 7
        %v909 = vsub.s32 0, %v908
        %v910 = vrot.slane %v873, %v909
        %v911 = vlaneseq
        %v912 = vshrl.u32 %v911, 7
        %v913 = vsub.s32 0, %v912
        %v914 = vrot.slane %v874, %v913
        %915 = vset.pattern.permute.xlu0 0
        %916 = vperm.xlu0 %915, %v886
        %v917 = vpop.permute.xlu0 %916
        %919 = vset.pattern.permute.xlu0 0
        %920 = vperm.xlu0 %919, %v890
        %v921 = vpop.permute.xlu0 %920
        %923 = vset.pattern.permute.xlu0 0
        %924 = vperm.xlu0 %923, %v894
        %v925 = vpop.permute.xlu0 %924
        %927 = vset.pattern.permute.xlu0 0
        %928 = vperm.xlu0 %927, %v898
        %v929 = vpop.permute.xlu0 %928
        %931 = vset.pattern.permute.xlu0 0
        %932 = vperm.xlu0 %931, %v902
        %v933 = vpop.permute.xlu0 %932
        %935 = vset.pattern.permute.xlu0 0
        %936 = vperm.xlu0 %935, %v906
        %v937 = vpop.permute.xlu0 %936
        %939 = vset.pattern.permute.xlu0 0
        %940 = vperm.xlu0 %939, %v910
        %v941 = vpop.permute.xlu0 %940
        %943 = vset.pattern.permute.xlu0 0
        %944 = vperm.xlu0 %943, %v914
        %v945 = vpop.permute.xlu0 %944
        %v947 = vmul.f32 %v850, %v917
        %v948 = vmul.f32 %v851, %v917
        %v949 = vmul.f32 %v852, %v921
        %v950 = vmul.f32 %v853, %v921
        %v951 = vmul.f32 %v854, %v925
        %v952 = vmul.f32 %v855, %v925
        %v953 = vmul.f32 %v856, %v929
        %v954 = vmul.f32 %v857, %v929
        %v955 = vmul.f32 %v858, %v933
        %v956 = vmul.f32 %v859, %v933
        %v957 = vmul.f32 %v860, %v937
        %v958 = vmul.f32 %v861, %v937
        %v959 = vmul.f32 %v862, %v941
        %v960 = vmul.f32 %v863, %v941
        %v961 = vmul.f32 %v864, %v945
        %v962 = vmul.f32 %v865, %v945
        %v963 = vadd.f32 %v834, %v947
        %v964 = vadd.f32 %v835, %v948
        %v965 = vadd.f32 %v836, %v949
        %v966 = vadd.f32 %v837, %v950
        %v967 = vadd.f32 %v838, %v951
        %v968 = vadd.f32 %v839, %v952
        %v969 = vadd.f32 %v840, %v953
        %v970 = vadd.f32 %v841, %v954
        %v971 = vadd.f32 %v842, %v955
        %v972 = vadd.f32 %v843, %v956
        %v973 = vadd.f32 %v844, %v957
        %v974 = vadd.f32 %v845, %v958
        %v975 = vadd.f32 %v846, %v959
        %v976 = vadd.f32 %v847, %v960
        %v977 = vadd.f32 %v848, %v961
        %v978 = vadd.f32 %v849, %v962
        %s979 = scalar_lea.vmem %s1, 32
        %v980 = vld [vmem:[%s979] sm:$0x1]
        %v981 = vld [vmem:[%s979 + $0x1] sm:$0x1]
        %v982 = vld [vmem:[%s979 + $0x2] sm:$0x1]
        %v983 = vld [vmem:[%s979 + $0x3] sm:$0x1]
        %v984 = vld [vmem:[%s979 + $0x4] sm:$0x1]
        %v985 = vld [vmem:[%s979 + $0x5] sm:$0x1]
        %v986 = vld [vmem:[%s979 + $0x6] sm:$0x1]
        %v987 = vld [vmem:[%s979 + $0x7] sm:$0x1]
        %v996 = vlaneseq
        %v997 = vshrl.u32 %v996, 7
        %v998 = vsub.s32 0, %v997
        %v999 = vrot.slane %v980, %v998
        %v1000 = vlaneseq
        %v1001 = vshrl.u32 %v1000, 7
        %v1002 = vsub.s32 0, %v1001
        %v1003 = vrot.slane %v981, %v1002
        %v1004 = vlaneseq
        %v1005 = vshrl.u32 %v1004, 7
        %v1006 = vsub.s32 0, %v1005
        %v1007 = vrot.slane %v982, %v1006
        %v1008 = vlaneseq
        %v1009 = vshrl.u32 %v1008, 7
        %v1010 = vsub.s32 0, %v1009
        %v1011 = vrot.slane %v983, %v1010
        %v1012 = vlaneseq
        %v1013 = vshrl.u32 %v1012, 7
        %v1014 = vsub.s32 0, %v1013
        %v1015 = vrot.slane %v984, %v1014
        %v1016 = vlaneseq
        %v1017 = vshrl.u32 %v1016, 7
        %v1018 = vsub.s32 0, %v1017
        %v1019 = vrot.slane %v985, %v1018
        %v1020 = vlaneseq
        %v1021 = vshrl.u32 %v1020, 7
        %v1022 = vsub.s32 0, %v1021
        %v1023 = vrot.slane %v986, %v1022
        %v1024 = vlaneseq
        %v1025 = vshrl.u32 %v1024, 7
        %v1026 = vsub.s32 0, %v1025
        %v1027 = vrot.slane %v987, %v1026
        %1028 = vset.pattern.permute.xlu0 0
        %1029 = vperm.xlu0 %1028, %v999
        %v1030 = vpop.permute.xlu0 %1029
        %1032 = vset.pattern.permute.xlu0 0
        %1033 = vperm.xlu0 %1032, %v1003
        %v1034 = vpop.permute.xlu0 %1033
        %1036 = vset.pattern.permute.xlu0 0
        %1037 = vperm.xlu0 %1036, %v1007
        %v1038 = vpop.permute.xlu0 %1037
        %1040 = vset.pattern.permute.xlu0 0
        %1041 = vperm.xlu0 %1040, %v1011
        %v1042 = vpop.permute.xlu0 %1041
        %1044 = vset.pattern.permute.xlu0 0
        %1045 = vperm.xlu0 %1044, %v1015
        %v1046 = vpop.permute.xlu0 %1045
        %1048 = vset.pattern.permute.xlu0 0
        %1049 = vperm.xlu0 %1048, %v1019
        %v1050 = vpop.permute.xlu0 %1049
        %1052 = vset.pattern.permute.xlu0 0
        %1053 = vperm.xlu0 %1052, %v1023
        %v1054 = vpop.permute.xlu0 %1053
        %1056 = vset.pattern.permute.xlu0 0
        %1057 = vperm.xlu0 %1056, %v1027
        %v1058 = vpop.permute.xlu0 %1057
        %v1060 = vmul.f32 %v850, %v1030
        %v1061 = vmul.f32 %v851, %v1030
        %v1062 = vmul.f32 %v852, %v1034
        %v1063 = vmul.f32 %v853, %v1034
        %v1064 = vmul.f32 %v854, %v1038
        %v1065 = vmul.f32 %v855, %v1038
        %v1066 = vmul.f32 %v856, %v1042
        %v1067 = vmul.f32 %v857, %v1042
        %v1068 = vmul.f32 %v858, %v1046
        %v1069 = vmul.f32 %v859, %v1046
        %v1070 = vmul.f32 %v860, %v1050
        %v1071 = vmul.f32 %v861, %v1050
        %v1072 = vmul.f32 %v862, %v1054
        %v1073 = vmul.f32 %v863, %v1054
        %v1074 = vmul.f32 %v864, %v1058
        %v1075 = vmul.f32 %v865, %v1058
        %1092 = vrot.lane.b32.xlu0 %v1060, 127
        %v1093 = vpop.permute.xlu0 %1092
        %1094 = vrot.lane.b32.xlu0 %v1061, 127
        %v1095 = vpop.permute.xlu0 %1094
        %1096 = vrot.lane.b32.xlu0 %v1062, 127
        %v1097 = vpop.permute.xlu0 %1096
        %1098 = vrot.lane.b32.xlu0 %v1063, 127
        %v1099 = vpop.permute.xlu0 %1098
        %1100 = vrot.lane.b32.xlu0 %v1064, 127
        %v1101 = vpop.permute.xlu0 %1100
        %1102 = vrot.lane.b32.xlu0 %v1065, 127
        %v1103 = vpop.permute.xlu0 %1102
        %1104 = vrot.lane.b32.xlu0 %v1066, 127
        %v1105 = vpop.permute.xlu0 %1104
        %1106 = vrot.lane.b32.xlu0 %v1067, 127
        %v1107 = vpop.permute.xlu0 %1106
        %1108 = vrot.lane.b32.xlu0 %v1068, 127
        %v1109 = vpop.permute.xlu0 %1108
        %1110 = vrot.lane.b32.xlu0 %v1069, 127
        %v1111 = vpop.permute.xlu0 %1110
        %1112 = vrot.lane.b32.xlu0 %v1070, 127
        %v1113 = vpop.permute.xlu0 %1112
        %1114 = vrot.lane.b32.xlu0 %v1071, 127
        %v1115 = vpop.permute.xlu0 %1114
        %1116 = vrot.lane.b32.xlu0 %v1072, 127
        %v1117 = vpop.permute.xlu0 %1116
        %1118 = vrot.lane.b32.xlu0 %v1073, 127
        %v1119 = vpop.permute.xlu0 %1118
        %1120 = vrot.lane.b32.xlu0 %v1074, 127
        %v1121 = vpop.permute.xlu0 %1120
        %1122 = vrot.lane.b32.xlu0 %v1075, 127
        %v1123 = vpop.permute.xlu0 %1122
        %v1140 = vadd.f32 %v963, %v1093
        %v1141 = vadd.f32 %v964, %v1095
        %v1142 = vadd.f32 %v965, %v1097
        %v1143 = vadd.f32 %v966, %v1099
        %v1144 = vadd.f32 %v967, %v1101
        %v1145 = vadd.f32 %v968, %v1103
        %v1146 = vadd.f32 %v969, %v1105
        %v1147 = vadd.f32 %v970, %v1107
        %v1148 = vadd.f32 %v971, %v1109
        %v1149 = vadd.f32 %v972, %v1111
        %v1150 = vadd.f32 %v973, %v1113
        %v1151 = vadd.f32 %v974, %v1115
        %v1152 = vadd.f32 %v975, %v1117
        %v1153 = vadd.f32 %v976, %v1119
        %v1154 = vadd.f32 %v977, %v1121
        %v1155 = vadd.f32 %v978, %v1123
        %s1156 = scalar_lea.vmem %s1, 40
        %v1157 = vld [vmem:[%s1156] sm:$0x1]
        %v1158 = vld [vmem:[%s1156 + $0x1] sm:$0x1]
        %v1159 = vld [vmem:[%s1156 + $0x2] sm:$0x1]
        %v1160 = vld [vmem:[%s1156 + $0x3] sm:$0x1]
        %v1161 = vld [vmem:[%s1156 + $0x4] sm:$0x1]
        %v1162 = vld [vmem:[%s1156 + $0x5] sm:$0x1]
        %v1163 = vld [vmem:[%s1156 + $0x6] sm:$0x1]
        %v1164 = vld [vmem:[%s1156 + $0x7] sm:$0x1]
        %v1173 = vlaneseq
        %v1174 = vshrl.u32 %v1173, 7
        %v1175 = vsub.s32 0, %v1174
        %v1176 = vrot.slane %v1157, %v1175
        %v1177 = vlaneseq
        %v1178 = vshrl.u32 %v1177, 7
        %v1179 = vsub.s32 0, %v1178
        %v1180 = vrot.slane %v1158, %v1179
        %v1181 = vlaneseq
        %v1182 = vshrl.u32 %v1181, 7
        %v1183 = vsub.s32 0, %v1182
        %v1184 = vrot.slane %v1159, %v1183
        %v1185 = vlaneseq
        %v1186 = vshrl.u32 %v1185, 7
        %v1187 = vsub.s32 0, %v1186
        %v1188 = vrot.slane %v1160, %v1187
        %v1189 = vlaneseq
        %v1190 = vshrl.u32 %v1189, 7
        %v1191 = vsub.s32 0, %v1190
        %v1192 = vrot.slane %v1161, %v1191
        %v1193 = vlaneseq
        %v1194 = vshrl.u32 %v1193, 7
        %v1195 = vsub.s32 0, %v1194
        %v1196 = vrot.slane %v1162, %v1195
        %v1197 = vlaneseq
        %v1198 = vshrl.u32 %v1197, 7
        %v1199 = vsub.s32 0, %v1198
        %v1200 = vrot.slane %v1163, %v1199
        %v1201 = vlaneseq
        %v1202 = vshrl.u32 %v1201, 7
        %v1203 = vsub.s32 0, %v1202
        %v1204 = vrot.slane %v1164, %v1203
        %1205 = vset.pattern.permute.xlu0 0
        %1206 = vperm.xlu0 %1205, %v1176
        %v1207 = vpop.permute.xlu0 %1206
        %1209 = vset.pattern.permute.xlu0 0
        %1210 = vperm.xlu0 %1209, %v1180
        %v1211 = vpop.permute.xlu0 %1210
        %1213 = vset.pattern.permute.xlu0 0
        %1214 = vperm.xlu0 %1213, %v1184
        %v1215 = vpop.permute.xlu0 %1214
        %1217 = vset.pattern.permute.xlu0 0
        %1218 = vperm.xlu0 %1217, %v1188
        %v1219 = vpop.permute.xlu0 %1218
        %1221 = vset.pattern.permute.xlu0 0
        %1222 = vperm.xlu0 %1221, %v1192
        %v1223 = vpop.permute.xlu0 %1222
        %1225 = vset.pattern.permute.xlu0 0
        %1226 = vperm.xlu0 %1225, %v1196
        %v1227 = vpop.permute.xlu0 %1226
        %1229 = vset.pattern.permute.xlu0 0
        %1230 = vperm.xlu0 %1229, %v1200
        %v1231 = vpop.permute.xlu0 %1230
        %1233 = vset.pattern.permute.xlu0 0
        %1234 = vperm.xlu0 %1233, %v1204
        %v1235 = vpop.permute.xlu0 %1234
        %v1237 = vmul.f32 %v850, %v1207
        %v1238 = vmul.f32 %v851, %v1207
        %v1239 = vmul.f32 %v852, %v1211
        %v1240 = vmul.f32 %v853, %v1211
        %v1241 = vmul.f32 %v854, %v1215
        %v1242 = vmul.f32 %v855, %v1215
        %v1243 = vmul.f32 %v856, %v1219
        %v1244 = vmul.f32 %v857, %v1219
        %v1245 = vmul.f32 %v858, %v1223
        %v1246 = vmul.f32 %v859, %v1223
        %v1247 = vmul.f32 %v860, %v1227
        %v1248 = vmul.f32 %v861, %v1227
        %v1249 = vmul.f32 %v862, %v1231
        %v1250 = vmul.f32 %v863, %v1231
        %v1251 = vmul.f32 %v864, %v1235
        %v1252 = vmul.f32 %v865, %v1235
        %1269 = vrot.lane.b32.xlu0 %v1237, 126
        %v1270 = vpop.permute.xlu0 %1269
        %1271 = vrot.lane.b32.xlu0 %v1238, 126
        %v1272 = vpop.permute.xlu0 %1271
        %1273 = vrot.lane.b32.xlu0 %v1239, 126
        %v1274 = vpop.permute.xlu0 %1273
        %1275 = vrot.lane.b32.xlu0 %v1240, 126
        %v1276 = vpop.permute.xlu0 %1275
        %1277 = vrot.lane.b32.xlu0 %v1241, 126
        %v1278 = vpop.permute.xlu0 %1277
        %1279 = vrot.lane.b32.xlu0 %v1242, 126
        %v1280 = vpop.permute.xlu0 %1279
        %1281 = vrot.lane.b32.xlu0 %v1243, 126
        %v1282 = vpop.permute.xlu0 %1281
        %1283 = vrot.lane.b32.xlu0 %v1244, 126
        %v1284 = vpop.permute.xlu0 %1283
        %1285 = vrot.lane.b32.xlu0 %v1245, 126
        %v1286 = vpop.permute.xlu0 %1285
        %1287 = vrot.lane.b32.xlu0 %v1246, 126
        %v1288 = vpop.permute.xlu0 %1287
        %1289 = vrot.lane.b32.xlu0 %v1247, 126
        %v1290 = vpop.permute.xlu0 %1289
        %1291 = vrot.lane.b32.xlu0 %v1248, 126
        %v1292 = vpop.permute.xlu0 %1291
        %1293 = vrot.lane.b32.xlu0 %v1249, 126
        %v1294 = vpop.permute.xlu0 %1293
        %1295 = vrot.lane.b32.xlu0 %v1250, 126
        %v1296 = vpop.permute.xlu0 %1295
        %1297 = vrot.lane.b32.xlu0 %v1251, 126
        %v1298 = vpop.permute.xlu0 %1297
        %1299 = vrot.lane.b32.xlu0 %v1252, 126
        %v1300 = vpop.permute.xlu0 %1299
        %v1317 = vadd.f32 %v1140, %v1270
        %v1318 = vadd.f32 %v1141, %v1272
        %v1319 = vadd.f32 %v1142, %v1274
        %v1320 = vadd.f32 %v1143, %v1276
        %v1321 = vadd.f32 %v1144, %v1278
        %v1322 = vadd.f32 %v1145, %v1280
        %v1323 = vadd.f32 %v1146, %v1282
        %v1324 = vadd.f32 %v1147, %v1284
        %v1325 = vadd.f32 %v1148, %v1286
        %v1326 = vadd.f32 %v1149, %v1288
        %v1327 = vadd.f32 %v1150, %v1290
        %v1328 = vadd.f32 %v1151, %v1292
        %v1329 = vadd.f32 %v1152, %v1294
        %v1330 = vadd.f32 %v1153, %v1296
        %v1331 = vadd.f32 %v1154, %v1298
        %v1332 = vadd.f32 %v1155, %v1300
        %v1333 = vld [vmem:[#allocation2 + $0x2] sm:$0xff]
        %v1334 = vld [vmem:[#allocation2 + $0xa] sm:$0xff]
        %v1335 = vld [vmem:[#allocation2 + $0x1a] sm:$0xff]
        %v1336 = vld [vmem:[#allocation2 + $0x22] sm:$0xff]
        %v1337 = vld [vmem:[#allocation2 + $0x32] sm:$0xff]
        %v1338 = vld [vmem:[#allocation2 + $0x3a] sm:$0xff]
        %v1339 = vld [vmem:[#allocation2 + $0x4a] sm:$0xff]
        %v1340 = vld [vmem:[#allocation2 + $0x52] sm:$0xff]
        %v1341 = vld [vmem:[#allocation2 + $0x62] sm:$0xff]
        %v1342 = vld [vmem:[#allocation2 + $0x6a] sm:$0xff]
        %v1343 = vld [vmem:[#allocation2 + $0x7a] sm:$0xff]
        %v1344 = vld [vmem:[#allocation2 + $0x82] sm:$0xff]
        %v1345 = vld [vmem:[#allocation2 + $0x92] sm:$0xff]
        %v1346 = vld [vmem:[#allocation2 + $0x9a] sm:$0xff]
        %v1347 = vld [vmem:[#allocation2 + $0xaa] sm:$0xff]
        %v1348 = vld [vmem:[#allocation2 + $0xb2] sm:$0xff]
        %s1349 = scalar_lea.vmem %s1, 48
        %v1350 = vld [vmem:[%s1349] sm:$0x1]
        %v1351 = vld [vmem:[%s1349 + $0x1] sm:$0x1]
        %v1352 = vld [vmem:[%s1349 + $0x2] sm:$0x1]
        %v1353 = vld [vmem:[%s1349 + $0x3] sm:$0x1]
        %v1354 = vld [vmem:[%s1349 + $0x4] sm:$0x1]
        %v1355 = vld [vmem:[%s1349 + $0x5] sm:$0x1]
        %v1356 = vld [vmem:[%s1349 + $0x6] sm:$0x1]
        %v1357 = vld [vmem:[%s1349 + $0x7] sm:$0x1]
        %v1366 = vlaneseq
        %v1367 = vshrl.u32 %v1366, 7
        %v1368 = vsub.s32 0, %v1367
        %v1369 = vrot.slane %v1350, %v1368
        %v1370 = vlaneseq
        %v1371 = vshrl.u32 %v1370, 7
        %v1372 = vsub.s32 0, %v1371
        %v1373 = vrot.slane %v1351, %v1372
        %v1374 = vlaneseq
        %v1375 = vshrl.u32 %v1374, 7
        %v1376 = vsub.s32 0, %v1375
        %v1377 = vrot.slane %v1352, %v1376
        %v1378 = vlaneseq
        %v1379 = vshrl.u32 %v1378, 7
        %v1380 = vsub.s32 0, %v1379
        %v1381 = vrot.slane %v1353, %v1380
        %v1382 = vlaneseq
        %v1383 = vshrl.u32 %v1382, 7
        %v1384 = vsub.s32 0, %v1383
        %v1385 = vrot.slane %v1354, %v1384
        %v1386 = vlaneseq
        %v1387 = vshrl.u32 %v1386, 7
        %v1388 = vsub.s32 0, %v1387
        %v1389 = vrot.slane %v1355, %v1388
        %v1390 = vlaneseq
        %v1391 = vshrl.u32 %v1390, 7
        %v1392 = vsub.s32 0, %v1391
        %v1393 = vrot.slane %v1356, %v1392
        %v1394 = vlaneseq
        %v1395 = vshrl.u32 %v1394, 7
        %v1396 = vsub.s32 0, %v1395
        %v1397 = vrot.slane %v1357, %v1396
        %1398 = vset.pattern.permute.xlu0 0
        %1399 = vperm.xlu0 %1398, %v1369
        %v1400 = vpop.permute.xlu0 %1399
        %1402 = vset.pattern.permute.xlu0 0
        %1403 = vperm.xlu0 %1402, %v1373
        %v1404 = vpop.permute.xlu0 %1403
        %1406 = vset.pattern.permute.xlu0 0
        %1407 = vperm.xlu0 %1406, %v1377
        %v1408 = vpop.permute.xlu0 %1407
        %1410 = vset.pattern.permute.xlu0 0
        %1411 = vperm.xlu0 %1410, %v1381
        %v1412 = vpop.permute.xlu0 %1411
        %1414 = vset.pattern.permute.xlu0 0
        %1415 = vperm.xlu0 %1414, %v1385
        %v1416 = vpop.permute.xlu0 %1415
        %1418 = vset.pattern.permute.xlu0 0
        %1419 = vperm.xlu0 %1418, %v1389
        %v1420 = vpop.permute.xlu0 %1419
        %1422 = vset.pattern.permute.xlu0 0
        %1423 = vperm.xlu0 %1422, %v1393
        %v1424 = vpop.permute.xlu0 %1423
        %1426 = vset.pattern.permute.xlu0 0
        %1427 = vperm.xlu0 %1426, %v1397
        %v1428 = vpop.permute.xlu0 %1427
        %v1430 = vmul.f32 %v1333, %v1400
        %v1431 = vmul.f32 %v1334, %v1400
        %v1432 = vmul.f32 %v1335, %v1404
        %v1433 = vmul.f32 %v1336, %v1404
        %v1434 = vmul.f32 %v1337, %v1408
        %v1435 = vmul.f32 %v1338, %v1408
        %v1436 = vmul.f32 %v1339, %v1412
        %v1437 = vmul.f32 %v1340, %v1412
        %v1438 = vmul.f32 %v1341, %v1416
        %v1439 = vmul.f32 %v1342, %v1416
        %v1440 = vmul.f32 %v1343, %v1420
        %v1441 = vmul.f32 %v1344, %v1420
        %v1442 = vmul.f32 %v1345, %v1424
        %v1443 = vmul.f32 %v1346, %v1424
        %v1444 = vmul.f32 %v1347, %v1428
        %v1445 = vmul.f32 %v1348, %v1428
        %v1446 = vadd.f32 %v1317, %v1430
        %v1447 = vadd.f32 %v1318, %v1431
        %v1448 = vadd.f32 %v1319, %v1432
        %v1449 = vadd.f32 %v1320, %v1433
        %v1450 = vadd.f32 %v1321, %v1434
        %v1451 = vadd.f32 %v1322, %v1435
        %v1452 = vadd.f32 %v1323, %v1436
        %v1453 = vadd.f32 %v1324, %v1437
        %v1454 = vadd.f32 %v1325, %v1438
        %v1455 = vadd.f32 %v1326, %v1439
        %v1456 = vadd.f32 %v1327, %v1440
        %v1457 = vadd.f32 %v1328, %v1441
        %v1458 = vadd.f32 %v1329, %v1442
        %v1459 = vadd.f32 %v1330, %v1443
        %v1460 = vadd.f32 %v1331, %v1444
        %v1461 = vadd.f32 %v1332, %v1445
        %s1462 = scalar_lea.vmem %s1, 56
        %v1463 = vld [vmem:[%s1462] sm:$0x1]
        %v1464 = vld [vmem:[%s1462 + $0x1] sm:$0x1]
        %v1465 = vld [vmem:[%s1462 + $0x2] sm:$0x1]
        %v1466 = vld [vmem:[%s1462 + $0x3] sm:$0x1]
        %v1467 = vld [vmem:[%s1462 + $0x4] sm:$0x1]
        %v1468 = vld [vmem:[%s1462 + $0x5] sm:$0x1]
        %v1469 = vld [vmem:[%s1462 + $0x6] sm:$0x1]
        %v1470 = vld [vmem:[%s1462 + $0x7] sm:$0x1]
        %v1479 = vlaneseq
        %v1480 = vshrl.u32 %v1479, 7
        %v1481 = vsub.s32 0, %v1480
        %v1482 = vrot.slane %v1463, %v1481
        %v1483 = vlaneseq
        %v1484 = vshrl.u32 %v1483, 7
        %v1485 = vsub.s32 0, %v1484
        %v1486 = vrot.slane %v1464, %v1485
        %v1487 = vlaneseq
        %v1488 = vshrl.u32 %v1487, 7
        %v1489 = vsub.s32 0, %v1488
        %v1490 = vrot.slane %v1465, %v1489
        %v1491 = vlaneseq
        %v1492 = vshrl.u32 %v1491, 7
        %v1493 = vsub.s32 0, %v1492
        %v1494 = vrot.slane %v1466, %v1493
        %v1495 = vlaneseq
        %v1496 = vshrl.u32 %v1495, 7
        %v1497 = vsub.s32 0, %v1496
        %v1498 = vrot.slane %v1467, %v1497
        %v1499 = vlaneseq
        %v1500 = vshrl.u32 %v1499, 7
        %v1501 = vsub.s32 0, %v1500
        %v1502 = vrot.slane %v1468, %v1501
        %v1503 = vlaneseq
        %v1504 = vshrl.u32 %v1503, 7
        %v1505 = vsub.s32 0, %v1504
        %v1506 = vrot.slane %v1469, %v1505
        %v1507 = vlaneseq
        %v1508 = vshrl.u32 %v1507, 7
        %v1509 = vsub.s32 0, %v1508
        %v1510 = vrot.slane %v1470, %v1509
        %1511 = vset.pattern.permute.xlu0 0
        %1512 = vperm.xlu0 %1511, %v1482
        %v1513 = vpop.permute.xlu0 %1512
        %1515 = vset.pattern.permute.xlu0 0
        %1516 = vperm.xlu0 %1515, %v1486
        %v1517 = vpop.permute.xlu0 %1516
        %1519 = vset.pattern.permute.xlu0 0
        %1520 = vperm.xlu0 %1519, %v1490
        %v1521 = vpop.permute.xlu0 %1520
        %1523 = vset.pattern.permute.xlu0 0
        %1524 = vperm.xlu0 %1523, %v1494
        %v1525 = vpop.permute.xlu0 %1524
        %1527 = vset.pattern.permute.xlu0 0
        %1528 = vperm.xlu0 %1527, %v1498
        %v1529 = vpop.permute.xlu0 %1528
        %1531 = vset.pattern.permute.xlu0 0
        %1532 = vperm.xlu0 %1531, %v1502
        %v1533 = vpop.permute.xlu0 %1532
        %1535 = vset.pattern.permute.xlu0 0
        %1536 = vperm.xlu0 %1535, %v1506
        %v1537 = vpop.permute.xlu0 %1536
        %1539 = vset.pattern.permute.xlu0 0
        %1540 = vperm.xlu0 %1539, %v1510
        %v1541 = vpop.permute.xlu0 %1540
        %v1543 = vmul.f32 %v1333, %v1513
        %v1544 = vmul.f32 %v1334, %v1513
        %v1545 = vmul.f32 %v1335, %v1517
        %v1546 = vmul.f32 %v1336, %v1517
        %v1547 = vmul.f32 %v1337, %v1521
        %v1548 = vmul.f32 %v1338, %v1521
        %v1549 = vmul.f32 %v1339, %v1525
        %v1550 = vmul.f32 %v1340, %v1525
        %v1551 = vmul.f32 %v1341, %v1529
        %v1552 = vmul.f32 %v1342, %v1529
        %v1553 = vmul.f32 %v1343, %v1533
        %v1554 = vmul.f32 %v1344, %v1533
        %v1555 = vmul.f32 %v1345, %v1537
        %v1556 = vmul.f32 %v1346, %v1537
        %v1557 = vmul.f32 %v1347, %v1541
        %v1558 = vmul.f32 %v1348, %v1541
        %1575 = vrot.lane.b32.xlu0 %v1543, 127
        %v1576 = vpop.permute.xlu0 %1575
        %1577 = vrot.lane.b32.xlu0 %v1544, 127
        %v1578 = vpop.permute.xlu0 %1577
        %1579 = vrot.lane.b32.xlu0 %v1545, 127
        %v1580 = vpop.permute.xlu0 %1579
        %1581 = vrot.lane.b32.xlu0 %v1546, 127
        %v1582 = vpop.permute.xlu0 %1581
        %1583 = vrot.lane.b32.xlu0 %v1547, 127
        %v1584 = vpop.permute.xlu0 %1583
        %1585 = vrot.lane.b32.xlu0 %v1548, 127
        %v1586 = vpop.permute.xlu0 %1585
        %1587 = vrot.lane.b32.xlu0 %v1549, 127
        %v1588 = vpop.permute.xlu0 %1587
        %1589 = vrot.lane.b32.xlu0 %v1550, 127
        %v1590 = vpop.permute.xlu0 %1589
        %1591 = vrot.lane.b32.xlu0 %v1551, 127
        %v1592 = vpop.permute.xlu0 %1591
        %1593 = vrot.lane.b32.xlu0 %v1552, 127
        %v1594 = vpop.permute.xlu0 %1593
        %1595 = vrot.lane.b32.xlu0 %v1553, 127
        %v1596 = vpop.permute.xlu0 %1595
        %1597 = vrot.lane.b32.xlu0 %v1554, 127
        %v1598 = vpop.permute.xlu0 %1597
        %1599 = vrot.lane.b32.xlu0 %v1555, 127
        %v1600 = vpop.permute.xlu0 %1599
        %1601 = vrot.lane.b32.xlu0 %v1556, 127
        %v1602 = vpop.permute.xlu0 %1601
        %1603 = vrot.lane.b32.xlu0 %v1557, 127
        %v1604 = vpop.permute.xlu0 %1603
        %1605 = vrot.lane.b32.xlu0 %v1558, 127
        %v1606 = vpop.permute.xlu0 %1605
        %v1623 = vadd.f32 %v1446, %v1576
        %v1624 = vadd.f32 %v1447, %v1578
        %v1625 = vadd.f32 %v1448, %v1580
        %v1626 = vadd.f32 %v1449, %v1582
        %v1627 = vadd.f32 %v1450, %v1584
        %v1628 = vadd.f32 %v1451, %v1586
        %v1629 = vadd.f32 %v1452, %v1588
        %v1630 = vadd.f32 %v1453, %v1590
        %v1631 = vadd.f32 %v1454, %v1592
        %v1632 = vadd.f32 %v1455, %v1594
        %v1633 = vadd.f32 %v1456, %v1596
        %v1634 = vadd.f32 %v1457, %v1598
        %v1635 = vadd.f32 %v1458, %v1600
        %v1636 = vadd.f32 %v1459, %v1602
        %v1637 = vadd.f32 %v1460, %v1604
        %v1638 = vadd.f32 %v1461, %v1606
        %s1639 = scalar_lea.vmem %s1, 64
        %v1640 = vld [vmem:[%s1639] sm:$0x1]
        %v1641 = vld [vmem:[%s1639 + $0x1] sm:$0x1]
        %v1642 = vld [vmem:[%s1639 + $0x2] sm:$0x1]
        %v1643 = vld [vmem:[%s1639 + $0x3] sm:$0x1]
        %v1644 = vld [vmem:[%s1639 + $0x4] sm:$0x1]
        %v1645 = vld [vmem:[%s1639 + $0x5] sm:$0x1]
        %v1646 = vld [vmem:[%s1639 + $0x6] sm:$0x1]
        %v1647 = vld [vmem:[%s1639 + $0x7] sm:$0x1]
        %v1656 = vlaneseq
        %v1657 = vshrl.u32 %v1656, 7
        %v1658 = vsub.s32 0, %v1657
        %v1659 = vrot.slane %v1640, %v1658
        %v1660 = vlaneseq
        %v1661 = vshrl.u32 %v1660, 7
        %v1662 = vsub.s32 0, %v1661
        %v1663 = vrot.slane %v1641, %v1662
        %v1664 = vlaneseq
        %v1665 = vshrl.u32 %v1664, 7
        %v1666 = vsub.s32 0, %v1665
        %v1667 = vrot.slane %v1642, %v1666
        %v1668 = vlaneseq
        %v1669 = vshrl.u32 %v1668, 7
        %v1670 = vsub.s32 0, %v1669
        %v1671 = vrot.slane %v1643, %v1670
        %v1672 = vlaneseq
        %v1673 = vshrl.u32 %v1672, 7
        %v1674 = vsub.s32 0, %v1673
        %v1675 = vrot.slane %v1644, %v1674
        %v1676 = vlaneseq
        %v1677 = vshrl.u32 %v1676, 7
        %v1678 = vsub.s32 0, %v1677
        %v1679 = vrot.slane %v1645, %v1678
        %v1680 = vlaneseq
        %v1681 = vshrl.u32 %v1680, 7
        %v1682 = vsub.s32 0, %v1681
        %v1683 = vrot.slane %v1646, %v1682
        %v1684 = vlaneseq
        %v1685 = vshrl.u32 %v1684, 7
        %v1686 = vsub.s32 0, %v1685
        %v1687 = vrot.slane %v1647, %v1686
        %1688 = vset.pattern.permute.xlu0 0
        %1689 = vperm.xlu0 %1688, %v1659
        %v1690 = vpop.permute.xlu0 %1689
        %1692 = vset.pattern.permute.xlu0 0
        %1693 = vperm.xlu0 %1692, %v1663
        %v1694 = vpop.permute.xlu0 %1693
        %1696 = vset.pattern.permute.xlu0 0
        %1697 = vperm.xlu0 %1696, %v1667
        %v1698 = vpop.permute.xlu0 %1697
        %1700 = vset.pattern.permute.xlu0 0
        %1701 = vperm.xlu0 %1700, %v1671
        %v1702 = vpop.permute.xlu0 %1701
        %1704 = vset.pattern.permute.xlu0 0
        %1705 = vperm.xlu0 %1704, %v1675
        %v1706 = vpop.permute.xlu0 %1705
        %1708 = vset.pattern.permute.xlu0 0
        %1709 = vperm.xlu0 %1708, %v1679
        %v1710 = vpop.permute.xlu0 %1709
        %1712 = vset.pattern.permute.xlu0 0
        %1713 = vperm.xlu0 %1712, %v1683
        %v1714 = vpop.permute.xlu0 %1713
        %1716 = vset.pattern.permute.xlu0 0
        %1717 = vperm.xlu0 %1716, %v1687
        %v1718 = vpop.permute.xlu0 %1717
        %v1720 = vmul.f32 %v1333, %v1690
        %v1721 = vmul.f32 %v1334, %v1690
        %v1722 = vmul.f32 %v1335, %v1694
        %v1723 = vmul.f32 %v1336, %v1694
        %v1724 = vmul.f32 %v1337, %v1698
        %v1725 = vmul.f32 %v1338, %v1698
        %v1726 = vmul.f32 %v1339, %v1702
        %v1727 = vmul.f32 %v1340, %v1702
        %v1728 = vmul.f32 %v1341, %v1706
        %v1729 = vmul.f32 %v1342, %v1706
        %v1730 = vmul.f32 %v1343, %v1710
        %v1731 = vmul.f32 %v1344, %v1710
        %v1732 = vmul.f32 %v1345, %v1714
        %v1733 = vmul.f32 %v1346, %v1714
        %v1734 = vmul.f32 %v1347, %v1718
        %v1735 = vmul.f32 %v1348, %v1718
        %1752 = vrot.lane.b32.xlu0 %v1720, 126
        %v1753 = vpop.permute.xlu0 %1752
        %1754 = vrot.lane.b32.xlu0 %v1721, 126
        %v1755 = vpop.permute.xlu0 %1754
        %1756 = vrot.lane.b32.xlu0 %v1722, 126
        %v1757 = vpop.permute.xlu0 %1756
        %1758 = vrot.lane.b32.xlu0 %v1723, 126
        %v1759 = vpop.permute.xlu0 %1758
        %1760 = vrot.lane.b32.xlu0 %v1724, 126
        %v1761 = vpop.permute.xlu0 %1760
        %1762 = vrot.lane.b32.xlu0 %v1725, 126
        %v1763 = vpop.permute.xlu0 %1762
        %1764 = vrot.lane.b32.xlu0 %v1726, 126
        %v1765 = vpop.permute.xlu0 %1764
        %1766 = vrot.lane.b32.xlu0 %v1727, 126
        %v1767 = vpop.permute.xlu0 %1766
        %1768 = vrot.lane.b32.xlu0 %v1728, 126
        %v1769 = vpop.permute.xlu0 %1768
        %1770 = vrot.lane.b32.xlu0 %v1729, 126
        %v1771 = vpop.permute.xlu0 %1770
        %1772 = vrot.lane.b32.xlu0 %v1730, 126
        %v1773 = vpop.permute.xlu0 %1772
        %1774 = vrot.lane.b32.xlu0 %v1731, 126
        %v1775 = vpop.permute.xlu0 %1774
        %1776 = vrot.lane.b32.xlu0 %v1732, 126
        %v1777 = vpop.permute.xlu0 %1776
        %1778 = vrot.lane.b32.xlu0 %v1733, 126
        %v1779 = vpop.permute.xlu0 %1778
        %1780 = vrot.lane.b32.xlu0 %v1734, 126
        %v1781 = vpop.permute.xlu0 %1780
        %1782 = vrot.lane.b32.xlu0 %v1735, 126
        %v1783 = vpop.permute.xlu0 %1782
        %v1800 = vadd.f32 %v1623, %v1753
        %v1801 = vadd.f32 %v1624, %v1755
        %v1802 = vadd.f32 %v1625, %v1757
        %v1803 = vadd.f32 %v1626, %v1759
        %v1804 = vadd.f32 %v1627, %v1761
        %v1805 = vadd.f32 %v1628, %v1763
        %v1806 = vadd.f32 %v1629, %v1765
        %v1807 = vadd.f32 %v1630, %v1767
        %v1808 = vadd.f32 %v1631, %v1769
        %v1809 = vadd.f32 %v1632, %v1771
        %v1810 = vadd.f32 %v1633, %v1773
        %v1811 = vadd.f32 %v1634, %v1775
        %v1812 = vadd.f32 %v1635, %v1777
        %v1813 = vadd.f32 %v1636, %v1779
        %v1814 = vadd.f32 %v1637, %v1781
        %v1815 = vadd.f32 %v1638, %v1783
        %v1816 = vcombine.low %v1800, %v1804
        %v1817 = vcombine.high %v1800, %v1804
        %v1819 = vunpack.c.l.s4 1983009808
        %v1820 = vunpack.c.0.s8 %v1819
        %v1821 = vlaneseq
        %v1822 = vshrl.u32 %v1821, 7
        %v1823 = vsub.s32 %v1820, %v1822
        %v1824 = vrot.slane %v1816, %v1823
        %v1826 = vunpack.c.l.s4 1983009808
        %v1827 = vunpack.c.0.s8 %v1826
        %v1828 = vlaneseq
        %v1829 = vshrl.u32 %v1828, 7
        %v1830 = vsub.s32 %v1827, %v1829
        %v1831 = vrot.slane %v1817, %v1830
        %v1832 = vcombine.low %v1802, %v1806
        %v1833 = vcombine.high %v1802, %v1806
        %v1835 = vunpack.c.l.s4 1983009808
        %v1836 = vunpack.c.0.s8 %v1835
        %v1837 = vlaneseq
        %v1838 = vshrl.u32 %v1837, 7
        %v1839 = vsub.s32 %v1836, %v1838
        %v1840 = vrot.slane %v1832, %v1839
        %v1842 = vunpack.c.l.s4 1983009808
        %v1843 = vunpack.c.0.s8 %v1842
        %v1844 = vlaneseq
        %v1845 = vshrl.u32 %v1844, 7
        %v1846 = vsub.s32 %v1843, %v1845
        %v1847 = vrot.slane %v1833, %v1846
        %v1848 = vcombine.low %v1808, %v1812
        %v1849 = vcombine.high %v1808, %v1812
        %v1851 = vunpack.c.l.s4 1983009808
        %v1852 = vunpack.c.0.s8 %v1851
        %v1853 = vlaneseq
        %v1854 = vshrl.u32 %v1853, 7
        %v1855 = vsub.s32 %v1852, %v1854
        %v1856 = vrot.slane %v1848, %v1855
        %v1858 = vunpack.c.l.s4 1983009808
        %v1859 = vunpack.c.0.s8 %v1858
        %v1860 = vlaneseq
        %v1861 = vshrl.u32 %v1860, 7
        %v1862 = vsub.s32 %v1859, %v1861
        %v1863 = vrot.slane %v1849, %v1862
        %v1864 = vcombine.low %v1810, %v1814
        %v1865 = vcombine.high %v1810, %v1814
        %v1867 = vunpack.c.l.s4 1983009808
        %v1868 = vunpack.c.0.s8 %v1867
        %v1869 = vlaneseq
        %v1870 = vshrl.u32 %v1869, 7
        %v1871 = vsub.s32 %v1868, %v1870
        %v1872 = vrot.slane %v1864, %v1871
        %v1874 = vunpack.c.l.s4 1983009808
        %v1875 = vunpack.c.0.s8 %v1874
        %v1876 = vlaneseq
        %v1877 = vshrl.u32 %v1876, 7
        %v1878 = vsub.s32 %v1875, %v1877
        %v1879 = vrot.slane %v1865, %v1878
        %v1880 = vcombine.low %v1824, %v1840
        %v1881 = vcombine.high %v1824, %v1840
        %v1883 = vunpack.c.l.s4 1934713408
        %v1884 = vunpack.c.0.s8 %v1883
        %v1885 = vlaneseq
        %v1886 = vshrl.u32 %v1885, 7
        %v1887 = vsub.s32 %v1884, %v1886
        %v1888 = vrot.slane %v1880, %v1887
        %v1890 = vunpack.c.l.s4 1934713408
        %v1891 = vunpack.c.0.s8 %v1890
        %v1892 = vlaneseq
        %v1893 = vshrl.u32 %v1892, 7
        %v1894 = vsub.s32 %v1891, %v1893
        %v1895 = vrot.slane %v1881, %v1894
        %v1896 = vcombine.low %v1831, %v1847
        %v1897 = vcombine.high %v1831, %v1847
        %v1899 = vunpack.c.l.s4 1934713408
        %v1900 = vunpack.c.0.s8 %v1899
        %v1901 = vlaneseq
        %v1902 = vshrl.u32 %v1901, 7
        %v1903 = vsub.s32 %v1900, %v1902
        %v1904 = vrot.slane %v1896, %v1903
        %v1906 = vunpack.c.l.s4 1934713408
        %v1907 = vunpack.c.0.s8 %v1906
        %v1908 = vlaneseq
        %v1909 = vshrl.u32 %v1908, 7
        %v1910 = vsub.s32 %v1907, %v1909
        %v1911 = vrot.slane %v1897, %v1910
        %v1912 = vcombine.low %v1856, %v1872
        %v1913 = vcombine.high %v1856, %v1872
        %v1915 = vunpack.c.l.s4 1934713408
        %v1916 = vunpack.c.0.s8 %v1915
        %v1917 = vlaneseq
        %v1918 = vshrl.u32 %v1917, 7
        %v1919 = vsub.s32 %v1916, %v1918
        %v1920 = vrot.slane %v1912, %v1919
        %v1922 = vunpack.c.l.s4 1934713408
        %v1923 = vunpack.c.0.s8 %v1922
        %v1924 = vlaneseq
        %v1925 = vshrl.u32 %v1924, 7
        %v1926 = vsub.s32 %v1923, %v1925
        %v1927 = vrot.slane %v1913, %v1926
        %v1928 = vcombine.low %v1863, %v1879
        %v1929 = vcombine.high %v1863, %v1879
        %v1931 = vunpack.c.l.s4 1934713408
        %v1932 = vunpack.c.0.s8 %v1931
        %v1933 = vlaneseq
        %v1934 = vshrl.u32 %v1933, 7
        %v1935 = vsub.s32 %v1932, %v1934
        %v1936 = vrot.slane %v1928, %v1935
        %v1938 = vunpack.c.l.s4 1934713408
        %v1939 = vunpack.c.0.s8 %v1938
        %v1940 = vlaneseq
        %v1941 = vshrl.u32 %v1940, 7
        %v1942 = vsub.s32 %v1939, %v1941
        %v1943 = vrot.slane %v1929, %v1942
        %v1944 = vcombine.low %v1888, %v1920
        %v1945 = vcombine.high %v1888, %v1920
        %v1946 = vcombine.low %v1895, %v1927
        %v1947 = vcombine.high %v1895, %v1927
        %v1948 = vcombine.low %v1904, %v1936
        %v1949 = vcombine.high %v1904, %v1936
        %v1950 = vcombine.low %v1911, %v1943
        %v1951 = vcombine.high %v1911, %v1943
        %v1952 = vcombine.low %v1801, %v1805
        %v1953 = vcombine.high %v1801, %v1805
        %v1955 = vunpack.c.l.s4 1983009808
        %v1956 = vunpack.c.0.s8 %v1955
        %v1957 = vlaneseq
        %v1958 = vshrl.u32 %v1957, 7
        %v1959 = vsub.s32 %v1956, %v1958
        %v1960 = vrot.slane %v1952, %v1959
        %v1962 = vunpack.c.l.s4 1983009808
        %v1963 = vunpack.c.0.s8 %v1962
        %v1964 = vlaneseq
        %v1965 = vshrl.u32 %v1964, 7
        %v1966 = vsub.s32 %v1963, %v1965
        %v1967 = vrot.slane %v1953, %v1966
        %v1968 = vcombine.low %v1803, %v1807
        %v1969 = vcombine.high %v1803, %v1807
        %v1971 = vunpack.c.l.s4 1983009808
        %v1972 = vunpack.c.0.s8 %v1971
        %v1973 = vlaneseq
        %v1974 = vshrl.u32 %v1973, 7
        %v1975 = vsub.s32 %v1972, %v1974
        %v1976 = vrot.slane %v1968, %v1975
        %v1978 = vunpack.c.l.s4 1983009808
        %v1979 = vunpack.c.0.s8 %v1978
        %v1980 = vlaneseq
        %v1981 = vshrl.u32 %v1980, 7
        %v1982 = vsub.s32 %v1979, %v1981
        %v1983 = vrot.slane %v1969, %v1982
        %v1984 = vcombine.low %v1809, %v1813
        %v1985 = vcombine.high %v1809, %v1813
        %v1987 = vunpack.c.l.s4 1983009808
        %v1988 = vunpack.c.0.s8 %v1987
        %v1989 = vlaneseq
        %v1990 = vshrl.u32 %v1989, 7
        %v1991 = vsub.s32 %v1988, %v1990
        %v1992 = vrot.slane %v1984, %v1991
        %v1994 = vunpack.c.l.s4 1983009808
        %v1995 = vunpack.c.0.s8 %v1994
        %v1996 = vlaneseq
        %v1997 = vshrl.u32 %v1996, 7
        %v1998 = vsub.s32 %v1995, %v1997
        %v1999 = vrot.slane %v1985, %v1998
        %v2000 = vcombine.low %v1811, %v1815
        %v2001 = vcombine.high %v1811, %v1815
        %v2003 = vunpack.c.l.s4 1983009808
        %v2004 = vunpack.c.0.s8 %v2003
        %v2005 = vlaneseq
        %v2006 = vshrl.u32 %v2005, 7
        %v2007 = vsub.s32 %v2004, %v2006
        %v2008 = vrot.slane %v2000, %v2007
        %v2010 = vunpack.c.l.s4 1983009808
        %v2011 = vunpack.c.0.s8 %v2010
        %v2012 = vlaneseq
        %v2013 = vshrl.u32 %v2012, 7
        %v2014 = vsub.s32 %v2011, %v2013
        %v2015 = vrot.slane %v2001, %v2014
        %v2016 = vcombine.low %v1960, %v1976
        %v2017 = vcombine.high %v1960, %v1976
        %v2019 = vunpack.c.l.s4 1934713408
        %v2020 = vunpack.c.0.s8 %v2019
        %v2021 = vlaneseq
        %v2022 = vshrl.u32 %v2021, 7
        %v2023 = vsub.s32 %v2020, %v2022
        %v2024 = vrot.slane %v2016, %v2023
        %v2026 = vunpack.c.l.s4 1934713408
        %v2027 = vunpack.c.0.s8 %v2026
        %v2028 = vlaneseq
        %v2029 = vshrl.u32 %v2028, 7
        %v2030 = vsub.s32 %v2027, %v2029
        %v2031 = vrot.slane %v2017, %v2030
        %v2032 = vcombine.low %v1967, %v1983
        %v2033 = vcombine.high %v1967, %v1983
        %v2035 = vunpack.c.l.s4 1934713408
        %v2036 = vunpack.c.0.s8 %v2035
        %v2037 = vlaneseq
        %v2038 = vshrl.u32 %v2037, 7
        %v2039 = vsub.s32 %v2036, %v2038
        %v2040 = vrot.slane %v2032, %v2039
        %v2042 = vunpack.c.l.s4 1934713408
        %v2043 = vunpack.c.0.s8 %v2042
        %v2044 = vlaneseq
        %v2045 = vshrl.u32 %v2044, 7
        %v2046 = vsub.s32 %v2043, %v2045
        %v2047 = vrot.slane %v2033, %v2046
        %v2048 = vcombine.low %v1992, %v2008
        %v2049 = vcombine.high %v1992, %v2008
        %v2051 = vunpack.c.l.s4 1934713408
        %v2052 = vunpack.c.0.s8 %v2051
        %v2053 = vlaneseq
        %v2054 = vshrl.u32 %v2053, 7
        %v2055 = vsub.s32 %v2052, %v2054
        %v2056 = vrot.slane %v2048, %v2055
        %v2058 = vunpack.c.l.s4 1934713408
        %v2059 = vunpack.c.0.s8 %v2058
        %v2060 = vlaneseq
        %v2061 = vshrl.u32 %v2060, 7
        %v2062 = vsub.s32 %v2059, %v2061
        %v2063 = vrot.slane %v2049, %v2062
        %v2064 = vcombine.low %v1999, %v2015
        %v2065 = vcombine.high %v1999, %v2015
        %v2067 = vunpack.c.l.s4 1934713408
        %v2068 = vunpack.c.0.s8 %v2067
        %v2069 = vlaneseq
        %v2070 = vshrl.u32 %v2069, 7
        %v2071 = vsub.s32 %v2068, %v2070
        %v2072 = vrot.slane %v2064, %v2071
        %v2074 = vunpack.c.l.s4 1934713408
        %v2075 = vunpack.c.0.s8 %v2074
        %v2076 = vlaneseq
        %v2077 = vshrl.u32 %v2076, 7
        %v2078 = vsub.s32 %v2075, %v2077
        %v2079 = vrot.slane %v2065, %v2078
        %v2080 = vcombine.low %v2024, %v2056
        %v2081 = vcombine.high %v2024, %v2056
        %v2082 = vcombine.low %v2031, %v2063
        %v2083 = vcombine.high %v2031, %v2063
        %v2084 = vcombine.low %v2040, %v2072
        %v2085 = vcombine.high %v2040, %v2072
        %v2086 = vcombine.low %v2047, %v2079
        %v2087 = vcombine.high %v2047, %v2079
        %2089 = vrot.lane.b32.xlu0 %v1945, 16
        %v2090 = vpop.permute.xlu0 %2089
        %2093 = vrot.lane.b32.xlu0 %v1946, 32
        %v2094 = vpop.permute.xlu0 %2093
        %2097 = vrot.lane.b32.xlu0 %v1947, 48
        %v2098 = vpop.permute.xlu0 %2097
        %2101 = vrot.lane.b32.xlu0 %v1948, 64
        %v2102 = vpop.permute.xlu0 %2101
        %2105 = vrot.lane.b32.xlu0 %v1949, 80
        %v2106 = vpop.permute.xlu0 %2105
        %2109 = vrot.lane.b32.xlu0 %v1950, 96
        %v2110 = vpop.permute.xlu0 %2109
        %2113 = vrot.lane.b32.xlu0 %v1951, 112
        %v2114 = vpop.permute.xlu0 %2113
        %2117 = vrot.lane.b32.xlu0 %v2081, 16
        %v2118 = vpop.permute.xlu0 %2117
        %2121 = vrot.lane.b32.xlu0 %v2082, 32
        %v2122 = vpop.permute.xlu0 %2121
        %2125 = vrot.lane.b32.xlu0 %v2083, 48
        %v2126 = vpop.permute.xlu0 %2125
        %2129 = vrot.lane.b32.xlu0 %v2084, 64
        %v2130 = vpop.permute.xlu0 %2129
        %2133 = vrot.lane.b32.xlu0 %v2085, 80
        %v2134 = vpop.permute.xlu0 %2133
        %2137 = vrot.lane.b32.xlu0 %v2086, 96
        %v2138 = vpop.permute.xlu0 %2137
        %2141 = vrot.lane.b32.xlu0 %v2087, 112
        %v2142 = vpop.permute.xlu0 %2141
        %vm2144 = vcmask 130048
        %v2145 = vsel %vm2144, %v1944, %v2090
        %vm2146 = vcmask 261120
        %v2147 = vsel %vm2146, %v2145, %v2094
        %vm2148 = vcmask 392192
        %v2149 = vsel %vm2148, %v2147, %v2098
        %vm2150 = vcmask 523264
        %v2151 = vsel %vm2150, %v2149, %v2102
        %vm2152 = vcmask 654336
        %v2153 = vsel %vm2152, %v2151, %v2106
        %vm2154 = vcmask 785408
        %v2155 = vsel %vm2154, %v2153, %v2110
        %vm2156 = vcmask 916480
        %v2157 = vsel %vm2156, %v2155, %v2114
        %v2158 = vsel %vm2144, %v2080, %v2118
        %v2159 = vsel %vm2146, %v2158, %v2122
        %v2160 = vsel %vm2148, %v2159, %v2126
        %v2161 = vsel %vm2150, %v2160, %v2130
        %v2162 = vsel %vm2152, %v2161, %v2134
        %v2163 = vsel %vm2154, %v2162, %v2138
        %v2164 = vsel %vm2156, %v2163, %v2142
        %v2165 = vld [vmem:[%s2] sm:$0xff]
        %2167 = vset.pattern.permute.xlu0 0
        %2168 = vperm.xlu0 %2167, %v2165
        %v2169 = vpop.permute.xlu0 %2168
        %v2171 = vadd.f32 %v2157, %v2169
        %v2172 = vadd.f32 %v2164, %v2169
        %v2173 = vmax.f32 %v2171, 0.0
        %v2174 = vmax.f32 %v2172, 0.0
        %v2175 = vld [vmem:[%s3] sm:$0xff]
        %v2176 = vld [vmem:[%s3 + $0x8] sm:$0xff]
        %v2177 = vld [vmem:[%s4] sm:$0xff]
        %v2178 = vld [vmem:[%s4 + $0x8] sm:$0xff]
        %2180 = vset.pattern.permute.xlu0 0
        %2181 = vperm.xlu0 %2180, %v2177
        %v2182 = vpop.permute.xlu0 %2181
        %2185 = vset.pattern.permute.xlu0 0
        %2186 = vperm.xlu0 %2185, %v2178
        %v2187 = vpop.permute.xlu0 %2186
        %vm2189 = vcmask 64512
        %v2191 = vsel %vm2189, %v2175, 0
        %v2194 = vsel %vm2189, %v2176, 0
        %2196 = vmatprep.subr.mxu0 %v2174
        %2197 = vmatpush1.msra.mxu0 %v2173
        %2198 = vmatprep.subr.mxu0 0.0
        %2199 = vmatpush1.msra.mxu0 0.0
        %2200 = vmatprep.subr.mxu0 0.0
        %2201 = vmatpush1.msra.mxu0 0.0
        %2202 = vmatprep.subr.mxu0 0.0
        %2203 = vmatpush1.msra.mxu0 0.0
        %2204 = vmatprep.subr.mxu0 0.0
        %2205 = vmatpush1.msra.mxu0 0.0
        %2206 = vmatprep.subr.mxu0 0.0
        %2207 = vmatpush1.msra.mxu0 0.0
        %2208 = vmatprep.subr.mxu0 0.0
        %2209 = vmatpush1.msra.mxu0 0.0
        %2210 = vmatprep.subr.mxu0 0.0
        %2211 = vmatpush1.msra.mxu0 0.0
        %2212 = vmatprep.subr.mxu0 0.0
        %2213 = vmatpush1.msra.mxu0 0.0
        %2214 = vmatprep.subr.mxu0 0.0
        %2215 = vmatpush1.msra.mxu0 0.0
        %2216 = vmatprep.subr.mxu0 0.0
        %2217 = vmatpush1.msra.mxu0 0.0
        %2218 = vmatprep.subr.mxu0 0.0
        %2219 = vmatpush1.msra.mxu0 0.0
        %2220 = vmatprep.subr.mxu0 0.0
        %2221 = vmatpush1.msra.mxu0 0.0
        %2222 = vmatprep.subr.mxu0 0.0
        %2223 = vmatpush1.msra.mxu0 0.0
        %2224 = vmatprep.subr.mxu0 0.0
        %2225 = vmatpush1.msra.mxu0 0.0
        %2226 = vmatprep.subr.mxu0 0.0
        %2227 = vmatpush1.msra.mxu0 0.0
        %2228 = vmatprep.subr.mxu0 0.0
        %2229 = vmatpush1.msra.mxu0 0.0
        %2230 = vmatprep.subr.mxu0 0.0
        %2231 = vmatpush1.msra.mxu0 0.0
        %2232 = vmatprep.subr.mxu0 0.0
        %2233 = vmatpush1.msra.mxu0 0.0
        %2234 = vmatprep.subr.mxu0 0.0
        %2235 = vmatpush1.msra.mxu0 0.0
        %2236 = vmatprep.subr.mxu0 0.0
        %2237 = vmatpush1.msra.mxu0 0.0
        %2238 = vmatprep.subr.mxu0 0.0
        %2239 = vmatpush1.msra.mxu0 0.0
        %2240 = vmatprep.subr.mxu0 0.0
        %2241 = vmatpush1.msra.mxu0 0.0
        %2242 = vmatprep.subr.mxu0 0.0
        %2243 = vmatpush1.msra.mxu0 0.0
        %2244 = vmatprep.subr.mxu0 0.0
        %2245 = vmatpush1.msra.mxu0 0.0
        %2246 = vmatprep.subr.mxu0 0.0
        %2247 = vmatpush1.msra.mxu0 0.0
        %2248 = vmatprep.subr.mxu0 0.0
        %2249 = vmatpush1.msra.mxu0 0.0
        %2250 = vmatprep.subr.mxu0 0.0
        %2251 = vmatpush1.msra.mxu0 0.0
        %2252 = vmatprep.subr.mxu0 0.0
        %2253 = vmatpush1.msra.mxu0 0.0
        %2254 = vmatprep.subr.mxu0 0.0
        %2255 = vmatpush1.msra.mxu0 0.0
        %2256 = vmatprep.subr.mxu0 0.0
        %2257 = vmatpush1.msra.mxu0 0.0
        %2258 = vmatprep.subr.mxu0 0.0
        %2259 = vmatpush1.msra.mxu0 0.0
        %2260 = vmatprep.mubr.f32.mxu0 0.0
        %2261 = vmatmul.mubr.f32.gmra.mrb[0].mxu0 %v2191
        %v2262 = vpop.f32.mrb[0].mxu0
        %v2263 = vadd.f32 %v2182, %v2262
        %v2264 = vpop.f32.mrb[0].mxu0
        %v2265 = vadd.f32 %v2182, %v2264
        %2266 = vmatprep.mubr.f32.mxu0 0.0
        %2267 = vmatmul.mubr.f32.gmra.mrb[0].mxu0 %v2194
        %v2268 = vpop.f32.mrb[0].mxu0
        %v2269 = vadd.f32 %v2187, %v2268
        %v2270 = vpop.f32.mrb[0].mxu0
        %v2271 = vadd.f32 %v2187, %v2270
        %2272 = vdwg.mxu0
        %2273 = vst [vmem:[%s244] sm:$0xff] %v2263
        %2274 = vst [vmem:[%s244 + $0x8] sm:$0xff] %v2265
        %2275 = vst [vmem:[%s244 + $0x10] sm:$0xff] %v2269
        %2276 = vst [vmem:[%s244 + $0x18] sm:$0xff] %v2271
        %p2277 = scmp.lt.s32.totalorder %s19, 1
        %s2278 = scalar_select %p2277, %s19, 1
        %s2279 = smul.addr %s2278, 4
        %s2280 = smul.addr %s2279, 8
        %s2281 = scalar_lea.vmem %s5, %s2280
        // Predicated region
        $region45: #{sep_conv2d.1} parent=39 // pred_check
          %p2282 = pneg %p147
        $region46: #{sep_conv2d.1} parent=39 // pred_check_branch
          %2284 = sbr.rel (%p2282) target = $region48
        $region47: #{sep_conv2d.1} parent=39 // pred_region
          _
        $region48: #{sep_conv2d.1} parent=39 // pred_fallthru
          _
      $region40: #{sep_conv2d.1} parent=5 // pred_fallthru
        _
      %p2285 = scmp.le.s32.totalorder 2, %s14
      // Predicated region
      $region49: #{sep_conv2d.1} parent=5 // pred_check
        %p2286 = pneg %p2285
      $region50: #{sep_conv2d.1} parent=5 // pred_check_branch
        %2288 = sbr.rel (%p2286) target = $region52
      $region51: #{sep_conv2d.1} parent=5 // pred_region
        %s2289 = ssub.s32 %s14, 2
        // Predicated region
        $region53: #{sep_conv2d.1} parent=51 // pred_check
          %p2290 = pneg %p153
        $region54: #{sep_conv2d.1} parent=51 // pred_check_branch
          %2292 = sbr.rel (%p2290) target = $region56
        $region55: #{sep_conv2d.1} parent=51 // pred_region
          %p2293 = scmp.lt.s32.totalorder %s20, 1
          %s2294 = scalar_select %p2293, %s20, 1
          %s2295 = smul.addr %s2294, 4
          %s2296 = smul.addr %s2295, 8
          %s2297 = scalar_lea.vmem %s5, %s2296
        $region56: #{sep_conv2d.1} parent=51 // pred_fallthru
          _
      $region52: #{sep_conv2d.1} parent=5 // pred_fallthru
        _
    $region6: #{sep_conv2d.1} parent=1 // loop_footer
      %s18 = sadd.s32 1, %s14
    $region7: #{sep_conv2d.1} parent=1 // loop_footer_branch
      %13 = sbr.rel target = $region3
    $region8: #{sep_conv2d.1} parent=1 // loop_exit
      _
    %2298 = vsyncpa [#allocation4], 1
    %s2299 = scalar_lea.sflag [#allocation4], 1
    %2300 = vsyncpa %s2299, 1

</llo_original>
